<compile_context>
chip_gen: v7x
topology: tpu7x:2x2x1
jax: 0.10.0
libtpu: 0.0.40
codegen_flags: <defaults>
</compile_context>

<pallas_src>
import jax
import jax.numpy as jnp
from jax.experimental import pallas as pl
from jax.experimental.pallas import tpu as pltpu


def _round_up(x, m):
    return (x + m - 1) // m * m


def _pick_batch_tile(batch, k_neg, dim, itemsize):
    """Largest batch tile whose double-buffered inputs fit a conservative VMEM budget."""
    # Per batch row we stream: neg (K*D) + pos_center (D) + pos_context (D), x2 for
    # the double-buffered pipeline.
    per_row = 2 * (k_neg * dim + 2 * dim) * itemsize
    budget = 24 * 1024 * 1024          # leaves headroom inside v7x's 64 MiB physical VMEM
    tb = budget // max(per_row, 1)
    tb = min(tb, 2048)                 # per-step overhead is fully amortized well before this
    tb = min(tb, _round_up(batch, 8))  # never tile wider than the (padded) batch
    return int(max(8, (tb // 8) * 8))  # sublane (8) alignment


def neg_sampling_loss(pos_center, pos_context, neg_context, *, tb=None,
                      vmem_limit_bytes=48 * 1024 * 1024):
    """Pallas TPU implementation of NegSamplingLoss.forward. Returns a scalar f32 loss."""
    B, D = pos_center.shape
    _, K, _ = neg_context.shape
    dtype = pos_center.dtype
    itemsize = jnp.dtype(dtype).itemsize

    if tb is None:
        tb = _pick_batch_tile(B, K, D, itemsize)
    tb = int(max(8, (min(int(tb), _round_up(B, 8)) // 8) * 8))

    num_tiles = _round_up(B, tb) // tb
    b_pad = num_tiles * tb

    # (B, K, D) -> (K, B, D): dense (TB, D) slabs per negative sample with zero-cost
    # in-kernel leading-dim views.
    # TODO(synk): have the producer emit neg_context as (K, B, D) directly so this one-time
    # XLA transpose (an extra HBM round trip of the large tensor) disappears.
    neg_t = jnp.transpose(neg_context, (1, 0, 2))

    if b_pad != B:
        pad = b_pad - B
        pos_center = jnp.pad(pos_center, ((0, pad), (0, 0)))
        pos_context = jnp.pad(pos_context, ((0, pad), (0, 0)))
        neg_t = jnp.pad(neg_t, ((0, 0), (0, pad), (0, 0)))

    # Full-precision MXU passes for f32 inputs (matches the PyTorch/f32 reference numerics);
    # bf16 inputs stay bf16 through the multiply and accumulate in f32 on the MXU.
    mxu_precision = (jax.lax.Precision.HIGHEST if jnp.dtype(dtype) == jnp.float32
                     else jax.lax.Precision.DEFAULT)

    def kernel(pc_ref, ctx_ref, negt_ref, out_ref):
        pc = pc_ref[...]                              # (tb, D), native dtype
        ctx = ctx_ref[...]                            # (tb, D)
        ones_d = jnp.ones((D, 1), dtype=pc.dtype)     # hoisted out of the k-loop

        # D-axis reductions on the MXU: (rows, D) @ (D, 1) instead of XLU lane reduces.
        cols = [-jnp.dot(pc * ctx, ones_d, precision=mxu_precision,
                         preferred_element_type=jnp.float32)]           # -pos_score (tb, 1)
        for k in range(K):
            nk = negt_ref[k]                          # zero-cost (tb, D) view of sample k
            cols.append(jnp.dot(nk * pc, ones_d, precision=mxu_precision,
                                preferred_element_type=jnp.float32))    # neg_score_k (tb, 1)

        # Fused positive/negative branch: one clip + one softplus pass over (tb, K+1).
        # -logsigmoid(score) = log1p(exp(-score));  -logsigmoid(-neg) = log1p(exp(neg)).
        scores = jnp.concatenate(cols, axis=1)        # (tb, K+1) f32
        scores = jnp.clip(scores, -10.0, 10.0)        # symmetric range == clamping pre-negation
        losses = jnp.log1p(jnp.exp(scores))           # (tb, K+1)

        if b_pad != B:  # zero-padded rows would otherwise each contribute (K+1)*log(2)
            rows = (pl.program_id(0) * tb
                    + jax.lax.broadcasted_iota(jnp.int32, (tb, 1), 0))
            losses = jnp.where(rows < B, losses, 0.0)

        # Lane-dense per-tile partial sum (full (8,128) slab -> unmasked stores); cross-tile
        # reduction happens in the wrapper so the batch axis stays "parallel".
        out_ref[...] = jnp.full((1, 8, 128), jnp.sum(losses), dtype=jnp.float32)

    partials = pl.pallas_call(
        kernel,
        out_shape=jax.ShapeDtypeStruct((num_tiles, 8, 128), jnp.float32),
        grid=(num_tiles,),
        in_specs=[
            pl.BlockSpec((tb, D), lambda i: (i, 0)),         # pos_center  (b_pad, D)
            pl.BlockSpec((tb, D), lambda i: (i, 0)),         # pos_context (b_pad, D)
            pl.BlockSpec((K, tb, D), lambda i: (0, i, 0)),   # neg_context (K, b_pad, D)
        ],
        out_specs=pl.BlockSpec((1, 8, 128), lambda i: (i, 0, 0)),
        compiler_params=pltpu.CompilerParams(
            dimension_semantics=("parallel",),
            vmem_limit_bytes=vmem_limit_bytes,
        ),
    )(pos_center, pos_context, neg_t)

    # Mean over the true batch: multiply by a compile-time 1/B instead of dividing.
    return jnp.sum(partials[:, 0, 0]) * (1.0 / B)


def _reference_loss(pos_center, pos_context, neg_context):
    """Pure-JAX reference mirroring the PyTorch forward exactly."""
    score = jnp.sum(pos_center * pos_context, axis=1)
    score = jnp.clip(score, -10.0, 10.0)
    score = -jax.nn.log_sigmoid(score)
    neg_score = jnp.einsum('bkd,bd->bk', neg_context, pos_center)
    neg_score = jnp.clip(neg_score, -10.0, 10.0)
    neg_score = -jnp.sum(jax.nn.log_sigmoid(-neg_score), axis=1)
    return jnp.mean(score + neg_score)


if __name__ == "__main__":
    key = jax.random.PRNGKey(0)

    # Case 1: the module's toy shape (B=8, K=5, D=32) — single grid tile, no padding.
    B, K, D = 8, 5, 32
    k1, k2, k3, k4 = jax.random.split(key, 4)
    pos_center = jax.random.normal(k1, (B, D), dtype=jnp.float32)
    pos_context = jax.random.normal(k2, (B, D), dtype=jnp.float32)
    neg_context = jax.random.normal(k3, (B, K, D), dtype=jnp.float32)

    loss = jax.block_until_ready(neg_sampling_loss(pos_center, pos_context, neg_context))
    ref = _reference_loss(pos_center, pos_context, neg_context)
    assert jnp.allclose(loss, ref, rtol=1e-4, atol=1e-4), (loss, ref)

    # Case 2: multi-tile grid + padded/masked last tile (B=20, tb=8 -> 3 tiles, 4 pad rows),
    # exercising the pipelined grid, parallel semantics and the row mask.
    B2, K2, D2 = 20, 4, 32
    q1, q2, q3 = jax.random.split(k4, 3)
    pc2 = jax.random.normal(q1, (B2, D2), dtype=jnp.float32)
    ctx2 = jax.random.normal(q2, (B2, D2), dtype=jnp.float32)
    neg2 = jax.random.normal(q3, (B2, K2, D2), dtype=jnp.float32)

    loss2 = jax.block_until_ready(neg_sampling_loss(pc2, ctx2, neg2, tb=8))
    ref2 = _reference_loss(pc2, ctx2, neg2)
    assert jnp.allclose(loss2, ref2, rtol=1e-4, atol=1e-4), (loss2, ref2)

    print("KERNEL_OK")
</pallas_src>

<mosaic_0001>
module attributes {stable_mosaic.version = 11 : i64} {
  func.func @kernel(%arg0: i32, %arg1: memref<8x32xf32, #tpu.memory_space<vmem>>, %arg2: memref<8x32xf32, #tpu.memory_space<vmem>>, %arg3: memref<5x8x32xf32, #tpu.memory_space<vmem>>, %arg4: memref<1x8x128xf32, #tpu.memory_space<vmem>>) attributes {dimension_semantics = [#tpu.dimension_semantics<parallel>], iteration_bounds = array<i64: 1>, scalar_prefetch = 0 : i64, scratch_operands = 0 : i64, tpu.core_type = #tpu.core_type<tc>, window_params = [{transform_indices = @transform_0, window_bounds = array<i64: 8, 32>}, {transform_indices = @transform_1, window_bounds = array<i64: 8, 32>}, {transform_indices = @transform_2, window_bounds = array<i64: 5, 8, 32>}, {transform_indices = @transform_3, window_bounds = array<i64: 1, 8, 128>}]} {
    %c0 = arith.constant 0 : index
    %c0_0 = arith.constant 0 : index
    %0 = vector.load %arg1[%c0, %c0_0] : memref<8x32xf32, #tpu.memory_space<vmem>>, vector<8x32xf32>
    %c0_1 = arith.constant 0 : index
    %c0_2 = arith.constant 0 : index
    %1 = vector.load %arg2[%c0_1, %c0_2] : memref<8x32xf32, #tpu.memory_space<vmem>>, vector<8x32xf32>
    %cst = arith.constant 1.000000e+00 : f32
    %2 = vector.broadcast %cst : f32 to vector<32x1xf32>
    %3 = arith.mulf %0, %1 : vector<8x32xf32>
    %cst_3 = arith.constant dense<0.000000e+00> : vector<8x1xf32>
    %4 = tpu.matmul %3, %2, %cst_3 {dimension_numbers = #tpu.dot_dimension_numbers<[1], [0], [0], [1], [0, 0, 1, 1], [], []>, precision = #tpu.contract_precision<fp32>} : vector<8x32xf32>, vector<32x1xf32>, vector<8x1xf32> -> vector<8x1xf32>
    %cst_4 = arith.constant 0.000000e+00 : f32
    %5 = vector.broadcast %cst_4 : f32 to vector<8x1xf32>
    %6 = arith.subf %5, %4 : vector<8x1xf32>
    %c0_5 = arith.constant 0 : index
    %c0_6 = arith.constant 0 : index
    %c0_7 = arith.constant 0 : index
    %7 = vector.load %arg3[%c0_5, %c0_6, %c0_7] : memref<5x8x32xf32, #tpu.memory_space<vmem>>, vector<1x8x32xf32>
    %8 = vector.shape_cast %7 : vector<1x8x32xf32> to vector<8x32xf32>
    %9 = arith.mulf %8, %0 : vector<8x32xf32>
    %cst_8 = arith.constant dense<0.000000e+00> : vector<8x1xf32>
    %10 = tpu.matmul %9, %2, %cst_8 {dimension_numbers = #tpu.dot_dimension_numbers<[1], [0], [0], [1], [0, 0, 1, 1], [], []>, precision = #tpu.contract_precision<fp32>} : vector<8x32xf32>, vector<32x1xf32>, vector<8x1xf32> -> vector<8x1xf32>
    %c1 = arith.constant 1 : index
    %c0_9 = arith.constant 0 : index
    %c0_10 = arith.constant 0 : index
    %11 = vector.load %arg3[%c1, %c0_9, %c0_10] : memref<5x8x32xf32, #tpu.memory_space<vmem>>, vector<1x8x32xf32>
    %12 = vector.shape_cast %11 : vector<1x8x32xf32> to vector<8x32xf32>
    %13 = arith.mulf %12, %0 : vector<8x32xf32>
    %cst_11 = arith.constant dense<0.000000e+00> : vector<8x1xf32>
    %14 = tpu.matmul %13, %2, %cst_11 {dimension_numbers = #tpu.dot_dimension_numbers<[1], [0], [0], [1], [0, 0, 1, 1], [], []>, precision = #tpu.contract_precision<fp32>} : vector<8x32xf32>, vector<32x1xf32>, vector<8x1xf32> -> vector<8x1xf32>
    %c2 = arith.constant 2 : index
    %c0_12 = arith.constant 0 : index
    %c0_13 = arith.constant 0 : index
    %15 = vector.load %arg3[%c2, %c0_12, %c0_13] : memref<5x8x32xf32, #tpu.memory_space<vmem>>, vector<1x8x32xf32>
    %16 = vector.shape_cast %15 : vector<1x8x32xf32> to vector<8x32xf32>
    %17 = arith.mulf %16, %0 : vector<8x32xf32>
    %cst_14 = arith.constant dense<0.000000e+00> : vector<8x1xf32>
    %18 = tpu.matmul %17, %2, %cst_14 {dimension_numbers = #tpu.dot_dimension_numbers<[1], [0], [0], [1], [0, 0, 1, 1], [], []>, precision = #tpu.contract_precision<fp32>} : vector<8x32xf32>, vector<32x1xf32>, vector<8x1xf32> -> vector<8x1xf32>
    %c3 = arith.constant 3 : index
    %c0_15 = arith.constant 0 : index
    %c0_16 = arith.constant 0 : index
    %19 = vector.load %arg3[%c3, %c0_15, %c0_16] : memref<5x8x32xf32, #tpu.memory_space<vmem>>, vector<1x8x32xf32>
    %20 = vector.shape_cast %19 : vector<1x8x32xf32> to vector<8x32xf32>
    %21 = arith.mulf %20, %0 : vector<8x32xf32>
    %cst_17 = arith.constant dense<0.000000e+00> : vector<8x1xf32>
    %22 = tpu.matmul %21, %2, %cst_17 {dimension_numbers = #tpu.dot_dimension_numbers<[1], [0], [0], [1], [0, 0, 1, 1], [], []>, precision = #tpu.contract_precision<fp32>} : vector<8x32xf32>, vector<32x1xf32>, vector<8x1xf32> -> vector<8x1xf32>
    %c4 = arith.constant 4 : index
    %c0_18 = arith.constant 0 : index
    %c0_19 = arith.constant 0 : index
    %23 = vector.load %arg3[%c4, %c0_18, %c0_19] : memref<5x8x32xf32, #tpu.memory_space<vmem>>, vector<1x8x32xf32>
    %24 = vector.shape_cast %23 : vector<1x8x32xf32> to vector<8x32xf32>
    %25 = arith.mulf %24, %0 : vector<8x32xf32>
    %cst_20 = arith.constant dense<0.000000e+00> : vector<8x1xf32>
    %26 = tpu.matmul %25, %2, %cst_20 {dimension_numbers = #tpu.dot_dimension_numbers<[1], [0], [0], [1], [0, 0, 1, 1], [], []>, precision = #tpu.contract_precision<fp32>} : vector<8x32xf32>, vector<32x1xf32>, vector<8x1xf32> -> vector<8x1xf32>
    %27 = tpu.concatenate %6, %10, %14, %18, %22, %26 in 1 : vector<8x1xf32>, vector<8x1xf32>, vector<8x1xf32>, vector<8x1xf32>, vector<8x1xf32>, vector<8x1xf32> -> vector<8x6xf32>
    %cst_21 = arith.constant -1.000000e+01 : f32
    %cst_22 = arith.constant 1.000000e+01 : f32
    %28 = vector.broadcast %cst_21 : f32 to vector<8x6xf32>
    %29 = arith.maximumf %28, %27 : vector<8x6xf32>
    %30 = vector.broadcast %cst_22 : f32 to vector<8x6xf32>
    %31 = arith.minimumf %30, %29 : vector<8x6xf32>
    %32 = math.exp %31 : vector<8x6xf32>
    %33 = math.log1p %32 : vector<8x6xf32>
    %34 = vector.shape_cast %33 : vector<8x6xf32> to vector<1x8x6xf32>
    %cst_23 = arith.constant dense<0.000000e+00> : vector<1xf32>
    %35 = vector.multi_reduction <add>, %34, %cst_23 [1, 2] : vector<1x8x6xf32> to vector<1xf32>
    %36 = vector.shape_cast %35 : vector<1xf32> to vector<1x1x1xf32>
    %37 = vector.extract %36[0, 0, 0] : f32 from vector<1x1x1xf32>
    %38 = vector.broadcast %37 : f32 to vector<1x8x128xf32>
    %c0_24 = arith.constant 0 : index
    %c0_25 = arith.constant 0 : index
    %c0_26 = arith.constant 0 : index
    %39 = vector.load %arg4[%c0_24, %c0_25, %c0_26] : memref<1x8x128xf32, #tpu.memory_space<vmem>>, vector<1x8x128xf32>
    tpu.vector_store %arg4[%c0_24, %c0_25, %c0_26], %38 {strides = array<i32>} : memref<1x8x128xf32, #tpu.memory_space<vmem>>, vector<1x8x128xf32>,
    return
  }
  func.func @transform_0(%arg0: i32) -> (i32, i32) {
    %c0_i32 = arith.constant 0 : i32
    %c0_i32_0 = arith.constant 0 : i32
    return %arg0, %c0_i32 : i32, i32
  }
  func.func @transform_1(%arg0: i32) -> (i32, i32) {
    %c0_i32 = arith.constant 0 : i32
    %c0_i32_0 = arith.constant 0 : i32
    return %arg0, %c0_i32 : i32, i32
  }
  func.func @transform_2(%arg0: i32) -> (i32, i32, i32) {
    %c0_i32 = arith.constant 0 : i32
    %c0_i32_0 = arith.constant 0 : i32
    %c0_i32_1 = arith.constant 0 : i32
    return %c0_i32, %arg0, %c0_i32_0 : i32, i32, i32
  }
  func.func @transform_3(%arg0: i32) -> (i32, i32, i32) {
    %c0_i32 = arith.constant 0 : i32
    %c0_i32_0 = arith.constant 0 : i32
    %c0_i32_1 = arith.constant 0 : i32
    return %arg0, %c0_i32, %c0_i32_0 : i32, i32, i32
  }
}

</mosaic_0001>

<llo_original>
// kernel: tpu_custom_call.1
$region0: #{tpu_custom_call.1}
  #allocation0 [shape = 'u32[]', space=smem, size = 0x4, offset = 0x4, fixed_abs, tag = 'smem constant byte address 0x4 - core index']
  #allocation1 [shape = 'u32[144,128]{1,0:T(1,128)}', space=vmem, size = 0x12000, scoped, tag = 'internal scratch']
  %s0 = inlined_call_operand.hbm [shape: f32[8,32], index: 0, kind: input, shape index: {}]
  %s1 = inlined_call_operand.hbm [shape: f32[8,32], index: 1, kind: input, shape index: {}]
  %s2 = inlined_call_operand.hbm [shape: f32[5,8,32], index: 2, kind: input, shape index: {}]
  %s3 = inlined_call_operand.hbm [shape: f32[1,8,128], index: 3, kind: output, shape index: {}]
  %s4 = sld [smem:[#allocation0]]
  $region34: #{tpu_custom_call.1} parent=0
    _
  %s6 = ssub.s32 1, %s4
  %s7 = scalar_select 0, %s6, %s4
  $region1: #{tpu_custom_call.1} parent=0
    #allocation2 [shape = 'u8[4096]{0}', space=vmem, size = 0x1000, scoped, tag = 'input window, operand 0, single buffered']
    #allocation3 [shape = 's32[1]{0}', space=sflag, size = 0x4, scoped, tag = 'scoped memory for tpu_custom_call.1']
    #allocation4 [shape = 's32[1]{0}', space=sflag, size = 0x4, scoped, tag = 'scoped memory for tpu_custom_call.1']
    #allocation5 [shape = 'u8[4096]{0}', space=vmem, size = 0x1000, scoped, tag = 'input window, operand 1, single buffered']
    #allocation6 [shape = 's32[1]{0}', space=sflag, size = 0x4, scoped, tag = 'scoped memory for tpu_custom_call.1']
    #allocation7 [shape = 'u8[20480]{0}', space=vmem, size = 0x5000, scoped, tag = 'input window, operand 2, single buffered']
    #allocation8 [shape = 'u8[4096]{0}', space=vmem, size = 0x1000, scoped, tag = 'output window, operand 0, single buffered']
    %8 = vsyncpa [#allocation3], 0
    %9 = vsyncpa [#allocation6], 0
    %10 = vsyncpa [#allocation4], 0
    // Predicated region
    $region2: #{tpu_custom_call.1} parent=1 // pred_check
      _
    $region3: #{tpu_custom_call.1} parent=1 // pred_check_branch
      %12 = sbr.rel (0) target = $region5
    $region4: #{tpu_custom_call.1} parent=1 // pred_region
      %s14 = ssub.s32 128, 128
      %15 = vsyncadd [#allocation3], %s14
      %s17 = sshll.u32 [#allocation2], 4
      %s18 = int_to_ptr.vmem [resolvable:$true] %s17
      %20 = dma.hbm_to_vmem [thread:$0]  %s0, 128, %s18, [#allocation3]
    $region5: #{tpu_custom_call.1} parent=1 // pred_fallthru
      _
    // Predicated region
    $region6: #{tpu_custom_call.1} parent=1 // pred_check
      _
    $region7: #{tpu_custom_call.1} parent=1 // pred_check_branch
      %22 = sbr.rel (0) target = $region9
    $region8: #{tpu_custom_call.1} parent=1 // pred_region
      %s24 = ssub.s32 128, 128
      %25 = vsyncadd [#allocation6], %s24
      %s27 = sshll.u32 [#allocation5], 4
      %s28 = int_to_ptr.vmem [resolvable:$true] %s27
      %30 = dma.hbm_to_vmem [thread:$0]  %s1, 128, %s28, [#allocation6]
    $region9: #{tpu_custom_call.1} parent=1 // pred_fallthru
      _
    // Predicated region
    $region10: #{tpu_custom_call.1} parent=1 // pred_check
      _
    $region11: #{tpu_custom_call.1} parent=1 // pred_check_branch
      %32 = sbr.rel (0) target = $region13
    $region12: #{tpu_custom_call.1} parent=1 // pred_region
      %s34 = ssub.s32 640, 640
      %35 = vsyncadd [#allocation6], %s34
      %s36 = sshll.u32 [#allocation7], 4
      %s37 = int_to_ptr.vmem [resolvable:$true] %s36
      %42 = dma.hbm_to_vmem [thread:$0]  %s2, 640, %s37, [#allocation6], 128, 128, 8
    $region13: #{tpu_custom_call.1} parent=1 // pred_fallthru
      _
    // Predicated region
    $region14: #{tpu_custom_call.1} parent=1 // pred_check
      _
    $region15: #{tpu_custom_call.1} parent=1 // pred_check_branch
      %44 = sbr.rel (0) target = $region17
    $region16: #{tpu_custom_call.1} parent=1 // pred_region
      %45 = dma.done [#allocation3], 128
    $region17: #{tpu_custom_call.1} parent=1 // pred_fallthru
      _
    // Predicated region
    $region18: #{tpu_custom_call.1} parent=1 // pred_check
      _
    $region19: #{tpu_custom_call.1} parent=1 // pred_check_branch
      %47 = sbr.rel (0) target = $region21
    $region20: #{tpu_custom_call.1} parent=1 // pred_region
      %48 = dma.done [#allocation6], 128
    $region21: #{tpu_custom_call.1} parent=1 // pred_fallthru
      _
    // Predicated region
    $region22: #{tpu_custom_call.1} parent=1 // pred_check
      _
    $region23: #{tpu_custom_call.1} parent=1 // pred_check_branch
      %50 = sbr.rel (0) target = $region25
    $region24: #{tpu_custom_call.1} parent=1 // pred_region
      %51 = dma.done [#allocation6], 640
    $region25: #{tpu_custom_call.1} parent=1 // pred_fallthru
      _
    %v52 = vld [vmem:[#allocation2] sm:$0xff]
    %v53 = vld [vmem:[#allocation5] sm:$0xff]
    %v54 = vmul.f32 %v52, %v53
    %vm55 = vcmask 261120
    %v57 = vsel %vm55, %v54, 0
    %59 = vmatprep.subr.mxu0 0.0
    %60 = vmatpush1.msra.mxu0 1.0
    %61 = vmatprep.subr.mxu0 0.0
    %62 = vmatpush1.msra.mxu0 1.0
    %63 = vmatprep.subr.mxu0 0.0
    %64 = vmatpush1.msra.mxu0 1.0
    %65 = vmatprep.subr.mxu0 0.0
    %66 = vmatpush1.msra.mxu0 1.0
    %67 = vmatprep.subr.mxu0 0.0
    %68 = vmatpush1.msra.mxu0 0.0
    %69 = vmatprep.subr.mxu0 0.0
    %70 = vmatpush1.msra.mxu0 0.0
    %71 = vmatprep.subr.mxu0 0.0
    %72 = vmatpush1.msra.mxu0 0.0
    %73 = vmatprep.subr.mxu0 0.0
    %74 = vmatpush1.msra.mxu0 0.0
    %75 = vmatprep.subr.mxu0 0.0
    %76 = vmatpush1.msra.mxu0 0.0
    %77 = vmatprep.subr.mxu0 0.0
    %78 = vmatpush1.msra.mxu0 0.0
    %79 = vmatprep.subr.mxu0 0.0
    %80 = vmatpush1.msra.mxu0 0.0
    %81 = vmatprep.subr.mxu0 0.0
    %82 = vmatpush1.msra.mxu0 0.0
    %83 = vmatprep.subr.mxu0 0.0
    %84 = vmatpush1.msra.mxu0 0.0
    %85 = vmatprep.subr.mxu0 0.0
    %86 = vmatpush1.msra.mxu0 0.0
    %87 = vmatprep.subr.mxu0 0.0
    %88 = vmatpush1.msra.mxu0 0.0
    %89 = vmatprep.subr.mxu0 0.0
    %90 = vmatpush1.msra.mxu0 0.0
    %91 = vmatprep.subr.mxu0 0.0
    %92 = vmatpush1.msra.mxu0 0.0
    %93 = vmatprep.subr.mxu0 0.0
    %94 = vmatpush1.msra.mxu0 0.0
    %95 = vmatprep.subr.mxu0 0.0
    %96 = vmatpush1.msra.mxu0 0.0
    %97 = vmatprep.subr.mxu0 0.0
    %98 = vmatpush1.msra.mxu0 0.0
    %99 = vmatprep.subr.mxu0 0.0
    %100 = vmatpush1.msra.mxu0 0.0
    %101 = vmatprep.subr.mxu0 0.0
    %102 = vmatpush1.msra.mxu0 0.0
    %103 = vmatprep.subr.mxu0 0.0
    %104 = vmatpush1.msra.mxu0 0.0
    %105 = vmatprep.subr.mxu0 0.0
    %106 = vmatpush1.msra.mxu0 0.0
    %107 = vmatprep.subr.mxu0 0.0
    %108 = vmatpush1.msra.mxu0 0.0
    %109 = vmatprep.subr.mxu0 0.0
    %110 = vmatpush1.msra.mxu0 0.0
    %111 = vmatprep.subr.mxu0 0.0
    %112 = vmatpush1.msra.mxu0 0.0
    %113 = vmatprep.subr.mxu0 0.0
    %114 = vmatpush1.msra.mxu0 0.0
    %115 = vmatprep.subr.mxu0 0.0
    %116 = vmatpush1.msra.mxu0 0.0
    %117 = vmatprep.subr.mxu0 0.0
    %118 = vmatpush1.msra.mxu0 0.0
    %119 = vmatprep.subr.mxu0 0.0
    %120 = vmatpush1.msra.mxu0 0.0
    %121 = vmatprep.subr.mxu0 0.0
    %122 = vmatpush1.msra.mxu0 0.0
    %123 = vmatprep.mubr.f32.mxu0 0.0
    %v124 = vand.u32 %v57, 4294901760
    %v125 = vsub.f32 %v57, %v124
    %v126 = vand.u32 %v125, 4294901760
    %v127 = vsub.f32 %v125, %v126
    %v128 = vand.u32 %v127, 4294901760
    %129 = vmatmul.mubr.f32.gmra.mrb[0].mxu0 %v128
    %v130 = vpop.f32.mrb[0].mxu0
    %v131 = vadd.f32 0.0, %v130
    %v132 = vpop.f32.mrb[0].mxu0
    %133 = vdwg.mxu0
    %134 = vmatprep.subr.mxu0 0.0
    %135 = vmatpush1.msra.mxu0 0.0
    %136 = vmatprep.subr.mxu0 0.0
    %137 = vmatpush1.msra.mxu0 0.0
    %138 = vmatprep.subr.mxu0 0.0
    %139 = vmatpush1.msra.mxu0 0.0
    %140 = vmatprep.subr.mxu0 0.0
    %141 = vmatpush1.msra.mxu0 0.0
    %142 = vmatprep.subr.mxu0 0.0
    %143 = vmatpush1.msra.mxu0 0.0
    %144 = vmatprep.subr.mxu0 0.0
    %145 = vmatpush1.msra.mxu0 0.0
    %146 = vmatprep.subr.mxu0 0.0
    %147 = vmatpush1.msra.mxu0 0.0
    %148 = vmatprep.subr.mxu0 0.0
    %149 = vmatpush1.msra.mxu0 0.0
    %150 = vmatprep.subr.mxu0 0.0
    %151 = vmatpush1.msra.mxu0 0.0
    %152 = vmatprep.subr.mxu0 0.0
    %153 = vmatpush1.msra.mxu0 0.0
    %154 = vmatprep.subr.mxu0 0.0
    %155 = vmatpush1.msra.mxu0 0.0
    %156 = vmatprep.subr.mxu0 0.0
    %157 = vmatpush1.msra.mxu0 0.0
    %158 = vmatprep.subr.mxu0 0.0
    %159 = vmatpush1.msra.mxu0 0.0
    %160 = vmatprep.subr.mxu0 0.0
    %161 = vmatpush1.msra.mxu0 0.0
    %162 = vmatprep.subr.mxu0 0.0
    %163 = vmatpush1.msra.mxu0 0.0
    %164 = vmatprep.subr.mxu0 0.0
    %165 = vmatpush1.msra.mxu0 0.0
    %166 = vmatprep.subr.mxu0 0.0
    %167 = vmatpush1.msra.mxu0 0.0
    %168 = vmatprep.subr.mxu0 0.0
    %169 = vmatpush1.msra.mxu0 0.0
    %170 = vmatprep.subr.mxu0 0.0
    %171 = vmatpush1.msra.mxu0 0.0
    %172 = vmatprep.subr.mxu0 0.0
    %173 = vmatpush1.msra.mxu0 0.0
    %174 = vmatprep.subr.mxu0 0.0
    %175 = vmatpush1.msra.mxu0 0.0
    %176 = vmatprep.subr.mxu0 0.0
    %177 = vmatpush1.msra.mxu0 0.0
    %178 = vmatprep.subr.mxu0 0.0
    %179 = vmatpush1.msra.mxu0 0.0
    %180 = vmatprep.subr.mxu0 0.0
    %181 = vmatpush1.msra.mxu0 0.0
    %182 = vmatprep.subr.mxu0 0.0
    %183 = vmatpush1.msra.mxu0 0.0
    %184 = vmatprep.subr.mxu0 0.0
    %185 = vmatpush1.msra.mxu0 0.0
    %186 = vmatprep.subr.mxu0 0.0
    %187 = vmatpush1.msra.mxu0 0.0
    %188 = vmatprep.subr.mxu0 0.0
    %189 = vmatpush1.msra.mxu0 0.0
    %190 = vmatprep.subr.mxu0 0.0
    %191 = vmatpush1.msra.mxu0 0.0
    %192 = vmatprep.subr.mxu0 0.0
    %193 = vmatpush1.msra.mxu0 0.0
    %194 = vmatprep.subr.mxu0 0.0
    %195 = vmatpush1.msra.mxu0 0.0
    %196 = vmatprep.subr.mxu0 0.0
    %197 = vmatpush1.msra.mxu0 0.0
    %198 = vmatprep.mubr.f32.mxu0 0.0
    %v199 = vand.u32 %v57, 4294901760
    %200 = vmatmul.mubr.f32.gmra.mrb[0].mxu0 %v199
    %v201 = vpop.f32.mrb[0].mxu0
    %v202 = vadd.f32 %v131, %v201
    %v203 = vpop.f32.mrb[0].mxu0
    %204 = vdwg.mxu0
    %205 = vmatprep.subr.mxu0 0.0
    %206 = vmatpush1.msra.mxu0 0.0
    %207 = vmatprep.subr.mxu0 0.0
    %208 = vmatpush1.msra.mxu0 0.0
    %209 = vmatprep.subr.mxu0 0.0
    %210 = vmatpush1.msra.mxu0 0.0
    %211 = vmatprep.subr.mxu0 0.0
    %212 = vmatpush1.msra.mxu0 0.0
    %213 = vmatprep.subr.mxu0 0.0
    %214 = vmatpush1.msra.mxu0 0.0
    %215 = vmatprep.subr.mxu0 0.0
    %216 = vmatpush1.msra.mxu0 0.0
    %217 = vmatprep.subr.mxu0 0.0
    %218 = vmatpush1.msra.mxu0 0.0
    %219 = vmatprep.subr.mxu0 0.0
    %220 = vmatpush1.msra.mxu0 0.0
    %221 = vmatprep.subr.mxu0 0.0
    %222 = vmatpush1.msra.mxu0 0.0
    %223 = vmatprep.subr.mxu0 0.0
    %224 = vmatpush1.msra.mxu0 0.0
    %225 = vmatprep.subr.mxu0 0.0
    %226 = vmatpush1.msra.mxu0 0.0
    %227 = vmatprep.subr.mxu0 0.0
    %228 = vmatpush1.msra.mxu0 0.0
    %229 = vmatprep.subr.mxu0 0.0
    %230 = vmatpush1.msra.mxu0 0.0
    %231 = vmatprep.subr.mxu0 0.0
    %232 = vmatpush1.msra.mxu0 0.0
    %233 = vmatprep.subr.mxu0 0.0
    %234 = vmatpush1.msra.mxu0 0.0
    %235 = vmatprep.subr.mxu0 0.0
    %236 = vmatpush1.msra.mxu0 0.0
    %237 = vmatprep.subr.mxu0 0.0
    %238 = vmatpush1.msra.mxu0 0.0
    %239 = vmatprep.subr.mxu0 0.0
    %240 = vmatpush1.msra.mxu0 0.0
    %241 = vmatprep.subr.mxu0 0.0
    %242 = vmatpush1.msra.mxu0 0.0
    %243 = vmatprep.subr.mxu0 0.0
    %244 = vmatpush1.msra.mxu0 0.0
    %245 = vmatprep.subr.mxu0 0.0
    %246 = vmatpush1.msra.mxu0 0.0
    %247 = vmatprep.subr.mxu0 0.0
    %248 = vmatpush1.msra.mxu0 0.0
    %249 = vmatprep.subr.mxu0 0.0
    %250 = vmatpush1.msra.mxu0 0.0
    %251 = vmatprep.subr.mxu0 0.0
    %252 = vmatpush1.msra.mxu0 0.0
    %253 = vmatprep.subr.mxu0 0.0
    %254 = vmatpush1.msra.mxu0 0.0
    %255 = vmatprep.subr.mxu0 0.0
    %256 = vmatpush1.msra.mxu0 0.0
    %257 = vmatprep.subr.mxu0 0.0
    %258 = vmatpush1.msra.mxu0 0.0
    %259 = vmatprep.subr.mxu0 0.0
    %260 = vmatpush1.msra.mxu0 0.0
    %261 = vmatprep.subr.mxu0 0.0
    %262 = vmatpush1.msra.mxu0 0.0
    %263 = vmatprep.subr.mxu0 0.0
    %264 = vmatpush1.msra.mxu0 0.0
    %265 = vmatprep.subr.mxu0 0.0
    %266 = vmatpush1.msra.mxu0 0.0
    %267 = vmatprep.subr.mxu0 0.0
    %268 = vmatpush1.msra.mxu0 0.0
    %269 = vmatprep.mubr.f32.mxu0 0.0
    %v270 = vand.u32 %v57, 4294901760
    %v271 = vsub.f32 %v57, %v270
    %272 = vmatmul.mubr.f32.gmra.mrb[0].mxu0 %v271
    %v273 = vpop.f32.mrb[0].mxu0
    %v274 = vadd.f32 %v202, %v273
    %v275 = vpop.f32.mrb[0].mxu0
    %276 = vdwg.mxu0
    %277 = vmatprep.subr.mxu0 0.0
    %278 = vmatpush1.msra.mxu0 1.0
    %279 = vmatprep.subr.mxu0 0.0
    %280 = vmatpush1.msra.mxu0 1.0
    %281 = vmatprep.subr.mxu0 0.0
    %282 = vmatpush1.msra.mxu0 1.0
    %283 = vmatprep.subr.mxu0 0.0
    %284 = vmatpush1.msra.mxu0 1.0
    %285 = vmatprep.subr.mxu0 0.0
    %286 = vmatpush1.msra.mxu0 0.0
    %287 = vmatprep.subr.mxu0 0.0
    %288 = vmatpush1.msra.mxu0 0.0
    %289 = vmatprep.subr.mxu0 0.0
    %290 = vmatpush1.msra.mxu0 0.0
    %291 = vmatprep.subr.mxu0 0.0
    %292 = vmatpush1.msra.mxu0 0.0
    %293 = vmatprep.subr.mxu0 0.0
    %294 = vmatpush1.msra.mxu0 0.0
    %295 = vmatprep.subr.mxu0 0.0
    %296 = vmatpush1.msra.mxu0 0.0
    %297 = vmatprep.subr.mxu0 0.0
    %298 = vmatpush1.msra.mxu0 0.0
    %299 = vmatprep.subr.mxu0 0.0
    %300 = vmatpush1.msra.mxu0 0.0
    %301 = vmatprep.subr.mxu0 0.0
    %302 = vmatpush1.msra.mxu0 0.0
    %303 = vmatprep.subr.mxu0 0.0
    %304 = vmatpush1.msra.mxu0 0.0
    %305 = vmatprep.subr.mxu0 0.0
    %306 = vmatpush1.msra.mxu0 0.0
    %307 = vmatprep.subr.mxu0 0.0
    %308 = vmatpush1.msra.mxu0 0.0
    %309 = vmatprep.subr.mxu0 0.0
    %310 = vmatpush1.msra.mxu0 0.0
    %311 = vmatprep.subr.mxu0 0.0
    %312 = vmatpush1.msra.mxu0 0.0
    %313 = vmatprep.subr.mxu0 0.0
    %314 = vmatpush1.msra.mxu0 0.0
    %315 = vmatprep.subr.mxu0 0.0
    %316 = vmatpush1.msra.mxu0 0.0
    %317 = vmatprep.subr.mxu0 0.0
    %318 = vmatpush1.msra.mxu0 0.0
    %319 = vmatprep.subr.mxu0 0.0
    %320 = vmatpush1.msra.mxu0 0.0
    %321 = vmatprep.subr.mxu0 0.0
    %322 = vmatpush1.msra.mxu0 0.0
    %323 = vmatprep.subr.mxu0 0.0
    %324 = vmatpush1.msra.mxu0 0.0
    %325 = vmatprep.subr.mxu0 0.0
    %326 = vmatpush1.msra.mxu0 0.0
    %327 = vmatprep.subr.mxu0 0.0
    %328 = vmatpush1.msra.mxu0 0.0
    %329 = vmatprep.subr.mxu0 0.0
    %330 = vmatpush1.msra.mxu0 0.0
    %331 = vmatprep.subr.mxu0 0.0
    %332 = vmatpush1.msra.mxu0 0.0
    %333 = vmatprep.subr.mxu0 0.0
    %334 = vmatpush1.msra.mxu0 0.0
    %335 = vmatprep.subr.mxu0 0.0
    %336 = vmatpush1.msra.mxu0 0.0
    %337 = vmatprep.subr.mxu0 0.0
    %338 = vmatpush1.msra.mxu0 0.0
    %339 = vmatprep.subr.mxu0 0.0
    %340 = vmatpush1.msra.mxu0 0.0
    %341 = vmatprep.mubr.f32.mxu0 0.0
    %v342 = vand.u32 %v57, 4294901760
    %v343 = vsub.f32 %v57, %v342
    %v344 = vand.u32 %v343, 4294901760
    %345 = vmatmul.mubr.f32.gmra.mrb[0].mxu0 %v344
    %v346 = vpop.f32.mrb[0].mxu0
    %v347 = vadd.f32 %v274, %v346
    %v348 = vpop.f32.mrb[0].mxu0
    %349 = vdwg.mxu0
    %350 = vmatprep.subr.mxu0 0.0
    %351 = vmatpush1.msra.mxu0 0.0
    %352 = vmatprep.subr.mxu0 0.0
    %353 = vmatpush1.msra.mxu0 0.0
    %354 = vmatprep.subr.mxu0 0.0
    %355 = vmatpush1.msra.mxu0 0.0
    %356 = vmatprep.subr.mxu0 0.0
    %357 = vmatpush1.msra.mxu0 0.0
    %358 = vmatprep.subr.mxu0 0.0
    %359 = vmatpush1.msra.mxu0 0.0
    %360 = vmatprep.subr.mxu0 0.0
    %361 = vmatpush1.msra.mxu0 0.0
    %362 = vmatprep.subr.mxu0 0.0
    %363 = vmatpush1.msra.mxu0 0.0
    %364 = vmatprep.subr.mxu0 0.0
    %365 = vmatpush1.msra.mxu0 0.0
    %366 = vmatprep.subr.mxu0 0.0
    %367 = vmatpush1.msra.mxu0 0.0
    %368 = vmatprep.subr.mxu0 0.0
    %369 = vmatpush1.msra.mxu0 0.0
    %370 = vmatprep.subr.mxu0 0.0
    %371 = vmatpush1.msra.mxu0 0.0
    %372 = vmatprep.subr.mxu0 0.0
    %373 = vmatpush1.msra.mxu0 0.0
    %374 = vmatprep.subr.mxu0 0.0
    %375 = vmatpush1.msra.mxu0 0.0
    %376 = vmatprep.subr.mxu0 0.0
    %377 = vmatpush1.msra.mxu0 0.0
    %378 = vmatprep.subr.mxu0 0.0
    %379 = vmatpush1.msra.mxu0 0.0
    %380 = vmatprep.subr.mxu0 0.0
    %381 = vmatpush1.msra.mxu0 0.0
    %382 = vmatprep.subr.mxu0 0.0
    %383 = vmatpush1.msra.mxu0 0.0
    %384 = vmatprep.subr.mxu0 0.0
    %385 = vmatpush1.msra.mxu0 0.0
    %386 = vmatprep.subr.mxu0 0.0
    %387 = vmatpush1.msra.mxu0 0.0
    %388 = vmatprep.subr.mxu0 0.0
    %389 = vmatpush1.msra.mxu0 0.0
    %390 = vmatprep.subr.mxu0 0.0
    %391 = vmatpush1.msra.mxu0 0.0
    %392 = vmatprep.subr.mxu0 0.0
    %393 = vmatpush1.msra.mxu0 0.0
    %394 = vmatprep.subr.mxu0 0.0
    %395 = vmatpush1.msra.mxu0 0.0
    %396 = vmatprep.subr.mxu0 0.0
    %397 = vmatpush1.msra.mxu0 0.0
    %398 = vmatprep.subr.mxu0 0.0
    %399 = vmatpush1.msra.mxu0 0.0
    %400 = vmatprep.subr.mxu0 0.0
    %401 = vmatpush1.msra.mxu0 0.0
    %402 = vmatprep.subr.mxu0 0.0
    %403 = vmatpush1.msra.mxu0 0.0
    %404 = vmatprep.subr.mxu0 0.0
    %405 = vmatpush1.msra.mxu0 0.0
    %406 = vmatprep.subr.mxu0 0.0
    %407 = vmatpush1.msra.mxu0 0.0
    %408 = vmatprep.subr.mxu0 0.0
    %409 = vmatpush1.msra.mxu0 0.0
    %410 = vmatprep.subr.mxu0 0.0
    %411 = vmatpush1.msra.mxu0 0.0
    %412 = vmatprep.subr.mxu0 0.0
    %413 = vmatpush1.msra.mxu0 0.0
    %414 = vmatprep.mubr.f32.mxu0 0.0
    %v415 = vand.u32 %v57, 4294901760
    %416 = vmatmul.mubr.f32.gmra.mrb[0].mxu0 %v415
    %v417 = vpop.f32.mrb[0].mxu0
    %v418 = vadd.f32 %v347, %v417
    %v419 = vpop.f32.mrb[0].mxu0
    %420 = vdwg.mxu0
    %421 = vmatprep.subr.mxu0 0.0
    %422 = vmatpush1.msra.mxu0 1.0
    %423 = vmatprep.subr.mxu0 0.0
    %424 = vmatpush1.msra.mxu0 1.0
    %425 = vmatprep.subr.mxu0 0.0
    %426 = vmatpush1.msra.mxu0 1.0
    %427 = vmatprep.subr.mxu0 0.0
    %428 = vmatpush1.msra.mxu0 1.0
    %429 = vmatprep.subr.mxu0 0.0
    %430 = vmatpush1.msra.mxu0 0.0
    %431 = vmatprep.subr.mxu0 0.0
    %432 = vmatpush1.msra.mxu0 0.0
    %433 = vmatprep.subr.mxu0 0.0
    %434 = vmatpush1.msra.mxu0 0.0
    %435 = vmatprep.subr.mxu0 0.0
    %436 = vmatpush1.msra.mxu0 0.0
    %437 = vmatprep.subr.mxu0 0.0
    %438 = vmatpush1.msra.mxu0 0.0
    %439 = vmatprep.subr.mxu0 0.0
    %440 = vmatpush1.msra.mxu0 0.0
    %441 = vmatprep.subr.mxu0 0.0
    %442 = vmatpush1.msra.mxu0 0.0
    %443 = vmatprep.subr.mxu0 0.0
    %444 = vmatpush1.msra.mxu0 0.0
    %445 = vmatprep.subr.mxu0 0.0
    %446 = vmatpush1.msra.mxu0 0.0
    %447 = vmatprep.subr.mxu0 0.0
    %448 = vmatpush1.msra.mxu0 0.0
    %449 = vmatprep.subr.mxu0 0.0
    %450 = vmatpush1.msra.mxu0 0.0
    %451 = vmatprep.subr.mxu0 0.0
    %452 = vmatpush1.msra.mxu0 0.0
    %453 = vmatprep.subr.mxu0 0.0
    %454 = vmatpush1.msra.mxu0 0.0
    %455 = vmatprep.subr.mxu0 0.0
    %456 = vmatpush1.msra.mxu0 0.0
    %457 = vmatprep.subr.mxu0 0.0
    %458 = vmatpush1.msra.mxu0 0.0
    %459 = vmatprep.subr.mxu0 0.0
    %460 = vmatpush1.msra.mxu0 0.0
    %461 = vmatprep.subr.mxu0 0.0
    %462 = vmatpush1.msra.mxu0 0.0
    %463 = vmatprep.subr.mxu0 0.0
    %464 = vmatpush1.msra.mxu0 0.0
    %465 = vmatprep.subr.mxu0 0.0
    %466 = vmatpush1.msra.mxu0 0.0
    %467 = vmatprep.subr.mxu0 0.0
    %468 = vmatpush1.msra.mxu0 0.0
    %469 = vmatprep.subr.mxu0 0.0
    %470 = vmatpush1.msra.mxu0 0.0
    %471 = vmatprep.subr.mxu0 0.0
    %472 = vmatpush1.msra.mxu0 0.0
    %473 = vmatprep.subr.mxu0 0.0
    %474 = vmatpush1.msra.mxu0 0.0
    %475 = vmatprep.subr.mxu0 0.0
    %476 = vmatpush1.msra.mxu0 0.0
    %477 = vmatprep.subr.mxu0 0.0
    %478 = vmatpush1.msra.mxu0 0.0
    %479 = vmatprep.subr.mxu0 0.0
    %480 = vmatpush1.msra.mxu0 0.0
    %481 = vmatprep.subr.mxu0 0.0
    %482 = vmatpush1.msra.mxu0 0.0
    %483 = vmatprep.subr.mxu0 0.0
    %484 = vmatpush1.msra.mxu0 0.0
    %485 = vmatprep.mubr.f32.mxu0 0.0
    %v486 = vand.u32 %v57, 4294901760
    %487 = vmatmul.mubr.f32.gmra.mrb[0].mxu0 %v486
    %v488 = vpop.f32.mrb[0].mxu0
    %v489 = vadd.f32 %v418, %v488
    %v490 = vpop.f32.mrb[0].mxu0
    %491 = vdwg.mxu0
    %v492 = vsub.f32 0.0, %v489
    %v493 = vld [vmem:[#allocation7] sm:$0xff]
    %v494 = vmul.f32 %v493, %v52
    %v496 = vsel %vm55, %v494, 0
    %498 = vmatprep.subr.mxu0 0.0
    %499 = vmatpush1.msra.mxu0 1.0
    %500 = vmatprep.subr.mxu0 0.0
    %501 = vmatpush1.msra.mxu0 1.0
    %502 = vmatprep.subr.mxu0 0.0
    %503 = vmatpush1.msra.mxu0 1.0
    %504 = vmatprep.subr.mxu0 0.0
    %505 = vmatpush1.msra.mxu0 1.0
    %506 = vmatprep.subr.mxu0 0.0
    %507 = vmatpush1.msra.mxu0 0.0
    %508 = vmatprep.subr.mxu0 0.0
    %509 = vmatpush1.msra.mxu0 0.0
    %510 = vmatprep.subr.mxu0 0.0
    %511 = vmatpush1.msra.mxu0 0.0
    %512 = vmatprep.subr.mxu0 0.0
    %513 = vmatpush1.msra.mxu0 0.0
    %514 = vmatprep.subr.mxu0 0.0
    %515 = vmatpush1.msra.mxu0 0.0
    %516 = vmatprep.subr.mxu0 0.0
    %517 = vmatpush1.msra.mxu0 0.0
    %518 = vmatprep.subr.mxu0 0.0
    %519 = vmatpush1.msra.mxu0 0.0
    %520 = vmatprep.subr.mxu0 0.0
    %521 = vmatpush1.msra.mxu0 0.0
    %522 = vmatprep.subr.mxu0 0.0
    %523 = vmatpush1.msra.mxu0 0.0
    %524 = vmatprep.subr.mxu0 0.0
    %525 = vmatpush1.msra.mxu0 0.0
    %526 = vmatprep.subr.mxu0 0.0
    %527 = vmatpush1.msra.mxu0 0.0
    %528 = vmatprep.subr.mxu0 0.0
    %529 = vmatpush1.msra.mxu0 0.0
    %530 = vmatprep.subr.mxu0 0.0
    %531 = vmatpush1.msra.mxu0 0.0
    %532 = vmatprep.subr.mxu0 0.0
    %533 = vmatpush1.msra.mxu0 0.0
    %534 = vmatprep.subr.mxu0 0.0
    %535 = vmatpush1.msra.mxu0 0.0
    %536 = vmatprep.subr.mxu0 0.0
    %537 = vmatpush1.msra.mxu0 0.0
    %538 = vmatprep.subr.mxu0 0.0
    %539 = vmatpush1.msra.mxu0 0.0
    %540 = vmatprep.subr.mxu0 0.0
    %541 = vmatpush1.msra.mxu0 0.0
    %542 = vmatprep.subr.mxu0 0.0
    %543 = vmatpush1.msra.mxu0 0.0
    %544 = vmatprep.subr.mxu0 0.0
    %545 = vmatpush1.msra.mxu0 0.0
    %546 = vmatprep.subr.mxu0 0.0
    %547 = vmatpush1.msra.mxu0 0.0
    %548 = vmatprep.subr.mxu0 0.0
    %549 = vmatpush1.msra.mxu0 0.0
    %550 = vmatprep.subr.mxu0 0.0
    %551 = vmatpush1.msra.mxu0 0.0
    %552 = vmatprep.subr.mxu0 0.0
    %553 = vmatpush1.msra.mxu0 0.0
    %554 = vmatprep.subr.mxu0 0.0
    %555 = vmatpush1.msra.mxu0 0.0
    %556 = vmatprep.subr.mxu0 0.0
    %557 = vmatpush1.msra.mxu0 0.0
    %558 = vmatprep.subr.mxu0 0.0
    %559 = vmatpush1.msra.mxu0 0.0
    %560 = vmatprep.subr.mxu0 0.0
    %561 = vmatpush1.msra.mxu0 0.0
    %562 = vmatprep.mubr.f32.mxu0 0.0
    %v563 = vand.u32 %v496, 4294901760
    %v564 = vsub.f32 %v496, %v563
    %v565 = vand.u32 %v564, 4294901760
    %v566 = vsub.f32 %v564, %v565
    %v567 = vand.u32 %v566, 4294901760
    %568 = vmatmul.mubr.f32.gmra.mrb[0].mxu0 %v567
    %v569 = vpop.f32.mrb[0].mxu0
    %v570 = vadd.f32 0.0, %v569
    %v571 = vpop.f32.mrb[0].mxu0
    %572 = vdwg.mxu0
    %573 = vmatprep.subr.mxu0 0.0
    %574 = vmatpush1.msra.mxu0 0.0
    %575 = vmatprep.subr.mxu0 0.0
    %576 = vmatpush1.msra.mxu0 0.0
    %577 = vmatprep.subr.mxu0 0.0
    %578 = vmatpush1.msra.mxu0 0.0
    %579 = vmatprep.subr.mxu0 0.0
    %580 = vmatpush1.msra.mxu0 0.0
    %581 = vmatprep.subr.mxu0 0.0
    %582 = vmatpush1.msra.mxu0 0.0
    %583 = vmatprep.subr.mxu0 0.0
    %584 = vmatpush1.msra.mxu0 0.0
    %585 = vmatprep.subr.mxu0 0.0
    %586 = vmatpush1.msra.mxu0 0.0
    %587 = vmatprep.subr.mxu0 0.0
    %588 = vmatpush1.msra.mxu0 0.0
    %589 = vmatprep.subr.mxu0 0.0
    %590 = vmatpush1.msra.mxu0 0.0
    %591 = vmatprep.subr.mxu0 0.0
    %592 = vmatpush1.msra.mxu0 0.0
    %593 = vmatprep.subr.mxu0 0.0
    %594 = vmatpush1.msra.mxu0 0.0
    %595 = vmatprep.subr.mxu0 0.0
    %596 = vmatpush1.msra.mxu0 0.0
    %597 = vmatprep.subr.mxu0 0.0
    %598 = vmatpush1.msra.mxu0 0.0
    %599 = vmatprep.subr.mxu0 0.0
    %600 = vmatpush1.msra.mxu0 0.0
    %601 = vmatprep.subr.mxu0 0.0
    %602 = vmatpush1.msra.mxu0 0.0
    %603 = vmatprep.subr.mxu0 0.0
    %604 = vmatpush1.msra.mxu0 0.0
    %605 = vmatprep.subr.mxu0 0.0
    %606 = vmatpush1.msra.mxu0 0.0
    %607 = vmatprep.subr.mxu0 0.0
    %608 = vmatpush1.msra.mxu0 0.0
    %609 = vmatprep.subr.mxu0 0.0
    %610 = vmatpush1.msra.mxu0 0.0
    %611 = vmatprep.subr.mxu0 0.0
    %612 = vmatpush1.msra.mxu0 0.0
    %613 = vmatprep.subr.mxu0 0.0
    %614 = vmatpush1.msra.mxu0 0.0
    %615 = vmatprep.subr.mxu0 0.0
    %616 = vmatpush1.msra.mxu0 0.0
    %617 = vmatprep.subr.mxu0 0.0
    %618 = vmatpush1.msra.mxu0 0.0
    %619 = vmatprep.subr.mxu0 0.0
    %620 = vmatpush1.msra.mxu0 0.0
    %621 = vmatprep.subr.mxu0 0.0
    %622 = vmatpush1.msra.mxu0 0.0
    %623 = vmatprep.subr.mxu0 0.0
    %624 = vmatpush1.msra.mxu0 0.0
    %625 = vmatprep.subr.mxu0 0.0
    %626 = vmatpush1.msra.mxu0 0.0
    %627 = vmatprep.subr.mxu0 0.0
    %628 = vmatpush1.msra.mxu0 0.0
    %629 = vmatprep.subr.mxu0 0.0
    %630 = vmatpush1.msra.mxu0 0.0
    %631 = vmatprep.subr.mxu0 0.0
    %632 = vmatpush1.msra.mxu0 0.0
    %633 = vmatprep.subr.mxu0 0.0
    %634 = vmatpush1.msra.mxu0 0.0
    %635 = vmatprep.subr.mxu0 0.0
    %636 = vmatpush1.msra.mxu0 0.0
    %637 = vmatprep.mubr.f32.mxu0 0.0
    %v638 = vand.u32 %v496, 4294901760
    %639 = vmatmul.mubr.f32.gmra.mrb[0].mxu0 %v638
    %v640 = vpop.f32.mrb[0].mxu0
    %v641 = vadd.f32 %v570, %v640
    %v642 = vpop.f32.mrb[0].mxu0
    %643 = vdwg.mxu0
    %644 = vmatprep.subr.mxu0 0.0
    %645 = vmatpush1.msra.mxu0 0.0
    %646 = vmatprep.subr.mxu0 0.0
    %647 = vmatpush1.msra.mxu0 0.0
    %648 = vmatprep.subr.mxu0 0.0
    %649 = vmatpush1.msra.mxu0 0.0
    %650 = vmatprep.subr.mxu0 0.0
    %651 = vmatpush1.msra.mxu0 0.0
    %652 = vmatprep.subr.mxu0 0.0
    %653 = vmatpush1.msra.mxu0 0.0
    %654 = vmatprep.subr.mxu0 0.0
    %655 = vmatpush1.msra.mxu0 0.0
    %656 = vmatprep.subr.mxu0 0.0
    %657 = vmatpush1.msra.mxu0 0.0
    %658 = vmatprep.subr.mxu0 0.0
    %659 = vmatpush1.msra.mxu0 0.0
    %660 = vmatprep.subr.mxu0 0.0
    %661 = vmatpush1.msra.mxu0 0.0
    %662 = vmatprep.subr.mxu0 0.0
    %663 = vmatpush1.msra.mxu0 0.0
    %664 = vmatprep.subr.mxu0 0.0
    %665 = vmatpush1.msra.mxu0 0.0
    %666 = vmatprep.subr.mxu0 0.0
    %667 = vmatpush1.msra.mxu0 0.0
    %668 = vmatprep.subr.mxu0 0.0
    %669 = vmatpush1.msra.mxu0 0.0
    %670 = vmatprep.subr.mxu0 0.0
    %671 = vmatpush1.msra.mxu0 0.0
    %672 = vmatprep.subr.mxu0 0.0
    %673 = vmatpush1.msra.mxu0 0.0
    %674 = vmatprep.subr.mxu0 0.0
    %675 = vmatpush1.msra.mxu0 0.0
    %676 = vmatprep.subr.mxu0 0.0
    %677 = vmatpush1.msra.mxu0 0.0
    %678 = vmatprep.subr.mxu0 0.0
    %679 = vmatpush1.msra.mxu0 0.0
    %680 = vmatprep.subr.mxu0 0.0
    %681 = vmatpush1.msra.mxu0 0.0
    %682 = vmatprep.subr.mxu0 0.0
    %683 = vmatpush1.msra.mxu0 0.0
    %684 = vmatprep.subr.mxu0 0.0
    %685 = vmatpush1.msra.mxu0 0.0
    %686 = vmatprep.subr.mxu0 0.0
    %687 = vmatpush1.msra.mxu0 0.0
    %688 = vmatprep.subr.mxu0 0.0
    %689 = vmatpush1.msra.mxu0 0.0
    %690 = vmatprep.subr.mxu0 0.0
    %691 = vmatpush1.msra.mxu0 0.0
    %692 = vmatprep.subr.mxu0 0.0
    %693 = vmatpush1.msra.mxu0 0.0
    %694 = vmatprep.subr.mxu0 0.0
    %695 = vmatpush1.msra.mxu0 0.0
    %696 = vmatprep.subr.mxu0 0.0
    %697 = vmatpush1.msra.mxu0 0.0
    %698 = vmatprep.subr.mxu0 0.0
    %699 = vmatpush1.msra.mxu0 0.0
    %700 = vmatprep.subr.mxu0 0.0
    %701 = vmatpush1.msra.mxu0 0.0
    %702 = vmatprep.subr.mxu0 0.0
    %703 = vmatpush1.msra.mxu0 0.0
    %704 = vmatprep.subr.mxu0 0.0
    %705 = vmatpush1.msra.mxu0 0.0
    %706 = vmatprep.subr.mxu0 0.0
    %707 = vmatpush1.msra.mxu0 0.0
    %708 = vmatprep.mubr.f32.mxu0 0.0
    %v709 = vand.u32 %v496, 4294901760
    %v710 = vsub.f32 %v496, %v709
    %711 = vmatmul.mubr.f32.gmra.mrb[0].mxu0 %v710
    %v712 = vpop.f32.mrb[0].mxu0
    %v713 = vadd.f32 %v641, %v712
    %v714 = vpop.f32.mrb[0].mxu0
    %715 = vdwg.mxu0
    %716 = vmatprep.subr.mxu0 0.0
    %717 = vmatpush1.msra.mxu0 1.0
    %718 = vmatprep.subr.mxu0 0.0
    %719 = vmatpush1.msra.mxu0 1.0
    %720 = vmatprep.subr.mxu0 0.0
    %721 = vmatpush1.msra.mxu0 1.0
    %722 = vmatprep.subr.mxu0 0.0
    %723 = vmatpush1.msra.mxu0 1.0
    %724 = vmatprep.subr.mxu0 0.0
    %725 = vmatpush1.msra.mxu0 0.0
    %726 = vmatprep.subr.mxu0 0.0
    %727 = vmatpush1.msra.mxu0 0.0
    %728 = vmatprep.subr.mxu0 0.0
    %729 = vmatpush1.msra.mxu0 0.0
    %730 = vmatprep.subr.mxu0 0.0
    %731 = vmatpush1.msra.mxu0 0.0
    %732 = vmatprep.subr.mxu0 0.0
    %733 = vmatpush1.msra.mxu0 0.0
    %734 = vmatprep.subr.mxu0 0.0
    %735 = vmatpush1.msra.mxu0 0.0
    %736 = vmatprep.subr.mxu0 0.0
    %737 = vmatpush1.msra.mxu0 0.0
    %738 = vmatprep.subr.mxu0 0.0
    %739 = vmatpush1.msra.mxu0 0.0
    %740 = vmatprep.subr.mxu0 0.0
    %741 = vmatpush1.msra.mxu0 0.0
    %742 = vmatprep.subr.mxu0 0.0
    %743 = vmatpush1.msra.mxu0 0.0
    %744 = vmatprep.subr.mxu0 0.0
    %745 = vmatpush1.msra.mxu0 0.0
    %746 = vmatprep.subr.mxu0 0.0
    %747 = vmatpush1.msra.mxu0 0.0
    %748 = vmatprep.subr.mxu0 0.0
    %749 = vmatpush1.msra.mxu0 0.0
    %750 = vmatprep.subr.mxu0 0.0
    %751 = vmatpush1.msra.mxu0 0.0
    %752 = vmatprep.subr.mxu0 0.0
    %753 = vmatpush1.msra.mxu0 0.0
    %754 = vmatprep.subr.mxu0 0.0
    %755 = vmatpush1.msra.mxu0 0.0
    %756 = vmatprep.subr.mxu0 0.0
    %757 = vmatpush1.msra.mxu0 0.0
    %758 = vmatprep.subr.mxu0 0.0
    %759 = vmatpush1.msra.mxu0 0.0
    %760 = vmatprep.subr.mxu0 0.0
    %761 = vmatpush1.msra.mxu0 0.0
    %762 = vmatprep.subr.mxu0 0.0
    %763 = vmatpush1.msra.mxu0 0.0
    %764 = vmatprep.subr.mxu0 0.0
    %765 = vmatpush1.msra.mxu0 0.0
    %766 = vmatprep.subr.mxu0 0.0
    %767 = vmatpush1.msra.mxu0 0.0
    %768 = vmatprep.subr.mxu0 0.0
    %769 = vmatpush1.msra.mxu0 0.0
    %770 = vmatprep.subr.mxu0 0.0
    %771 = vmatpush1.msra.mxu0 0.0
    %772 = vmatprep.subr.mxu0 0.0
    %773 = vmatpush1.msra.mxu0 0.0
    %774 = vmatprep.subr.mxu0 0.0
    %775 = vmatpush1.msra.mxu0 0.0
    %776 = vmatprep.subr.mxu0 0.0
    %777 = vmatpush1.msra.mxu0 0.0
    %778 = vmatprep.subr.mxu0 0.0
    %779 = vmatpush1.msra.mxu0 0.0
    %780 = vmatprep.mubr.f32.mxu0 0.0
    %v781 = vand.u32 %v496, 4294901760
    %v782 = vsub.f32 %v496, %v781
    %v783 = vand.u32 %v782, 4294901760
    %784 = vmatmul.mubr.f32.gmra.mrb[0].mxu0 %v783
    %v785 = vpop.f32.mrb[0].mxu0
    %v786 = vadd.f32 %v713, %v785
    %v787 = vpop.f32.mrb[0].mxu0
    %788 = vdwg.mxu0
    %789 = vmatprep.subr.mxu0 0.0
    %790 = vmatpush1.msra.mxu0 0.0
    %791 = vmatprep.subr.mxu0 0.0
    %792 = vmatpush1.msra.mxu0 0.0
    %793 = vmatprep.subr.mxu0 0.0
    %794 = vmatpush1.msra.mxu0 0.0
    %795 = vmatprep.subr.mxu0 0.0
    %796 = vmatpush1.msra.mxu0 0.0
    %797 = vmatprep.subr.mxu0 0.0
    %798 = vmatpush1.msra.mxu0 0.0
    %799 = vmatprep.subr.mxu0 0.0
    %800 = vmatpush1.msra.mxu0 0.0
    %801 = vmatprep.subr.mxu0 0.0
    %802 = vmatpush1.msra.mxu0 0.0
    %803 = vmatprep.subr.mxu0 0.0
    %804 = vmatpush1.msra.mxu0 0.0
    %805 = vmatprep.subr.mxu0 0.0
    %806 = vmatpush1.msra.mxu0 0.0
    %807 = vmatprep.subr.mxu0 0.0
    %808 = vmatpush1.msra.mxu0 0.0
    %809 = vmatprep.subr.mxu0 0.0
    %810 = vmatpush1.msra.mxu0 0.0
    %811 = vmatprep.subr.mxu0 0.0
    %812 = vmatpush1.msra.mxu0 0.0
    %813 = vmatprep.subr.mxu0 0.0
    %814 = vmatpush1.msra.mxu0 0.0
    %815 = vmatprep.subr.mxu0 0.0
    %816 = vmatpush1.msra.mxu0 0.0
    %817 = vmatprep.subr.mxu0 0.0
    %818 = vmatpush1.msra.mxu0 0.0
    %819 = vmatprep.subr.mxu0 0.0
    %820 = vmatpush1.msra.mxu0 0.0
    %821 = vmatprep.subr.mxu0 0.0
    %822 = vmatpush1.msra.mxu0 0.0
    %823 = vmatprep.subr.mxu0 0.0
    %824 = vmatpush1.msra.mxu0 0.0
    %825 = vmatprep.subr.mxu0 0.0
    %826 = vmatpush1.msra.mxu0 0.0
    %827 = vmatprep.subr.mxu0 0.0
    %828 = vmatpush1.msra.mxu0 0.0
    %829 = vmatprep.subr.mxu0 0.0
    %830 = vmatpush1.msra.mxu0 0.0
    %831 = vmatprep.subr.mxu0 0.0
    %832 = vmatpush1.msra.mxu0 0.0
    %833 = vmatprep.subr.mxu0 0.0
    %834 = vmatpush1.msra.mxu0 0.0
    %835 = vmatprep.subr.mxu0 0.0
    %836 = vmatpush1.msra.mxu0 0.0
    %837 = vmatprep.subr.mxu0 0.0
    %838 = vmatpush1.msra.mxu0 0.0
    %839 = vmatprep.subr.mxu0 0.0
    %840 = vmatpush1.msra.mxu0 0.0
    %841 = vmatprep.subr.mxu0 0.0
    %842 = vmatpush1.msra.mxu0 0.0
    %843 = vmatprep.subr.mxu0 0.0
    %844 = vmatpush1.msra.mxu0 0.0
    %845 = vmatprep.subr.mxu0 0.0
    %846 = vmatpush1.msra.mxu0 0.0
    %847 = vmatprep.subr.mxu0 0.0
    %848 = vmatpush1.msra.mxu0 0.0
    %849 = vmatprep.subr.mxu0 0.0
    %850 = vmatpush1.msra.mxu0 0.0
    %851 = vmatprep.subr.mxu0 0.0
    %852 = vmatpush1.msra.mxu0 0.0
    %853 = vmatprep.mubr.f32.mxu0 0.0
    %v854 = vand.u32 %v496, 4294901760
    %855 = vmatmul.mubr.f32.gmra.mrb[0].mxu0 %v854
    %v856 = vpop.f32.mrb[0].mxu0
    %v857 = vadd.f32 %v786, %v856
    %v858 = vpop.f32.mrb[0].mxu0
    %859 = vdwg.mxu0
    %860 = vmatprep.subr.mxu0 0.0
    %861 = vmatpush1.msra.mxu0 1.0
    %862 = vmatprep.subr.mxu0 0.0
    %863 = vmatpush1.msra.mxu0 1.0
    %864 = vmatprep.subr.mxu0 0.0
    %865 = vmatpush1.msra.mxu0 1.0
    %866 = vmatprep.subr.mxu0 0.0
    %867 = vmatpush1.msra.mxu0 1.0
    %868 = vmatprep.subr.mxu0 0.0
    %869 = vmatpush1.msra.mxu0 0.0
    %870 = vmatprep.subr.mxu0 0.0
    %871 = vmatpush1.msra.mxu0 0.0
    %872 = vmatprep.subr.mxu0 0.0
    %873 = vmatpush1.msra.mxu0 0.0
    %874 = vmatprep.subr.mxu0 0.0
    %875 = vmatpush1.msra.mxu0 0.0
    %876 = vmatprep.subr.mxu0 0.0
    %877 = vmatpush1.msra.mxu0 0.0
    %878 = vmatprep.subr.mxu0 0.0
    %879 = vmatpush1.msra.mxu0 0.0
    %880 = vmatprep.subr.mxu0 0.0
    %881 = vmatpush1.msra.mxu0 0.0
    %882 = vmatprep.subr.mxu0 0.0
    %883 = vmatpush1.msra.mxu0 0.0
    %884 = vmatprep.subr.mxu0 0.0
    %885 = vmatpush1.msra.mxu0 0.0
    %886 = vmatprep.subr.mxu0 0.0
    %887 = vmatpush1.msra.mxu0 0.0
    %888 = vmatprep.subr.mxu0 0.0
    %889 = vmatpush1.msra.mxu0 0.0
    %890 = vmatprep.subr.mxu0 0.0
    %891 = vmatpush1.msra.mxu0 0.0
    %892 = vmatprep.subr.mxu0 0.0
    %893 = vmatpush1.msra.mxu0 0.0
    %894 = vmatprep.subr.mxu0 0.0
    %895 = vmatpush1.msra.mxu0 0.0
    %896 = vmatprep.subr.mxu0 0.0
    %897 = vmatpush1.msra.mxu0 0.0
    %898 = vmatprep.subr.mxu0 0.0
    %899 = vmatpush1.msra.mxu0 0.0
    %900 = vmatprep.subr.mxu0 0.0
    %901 = vmatpush1.msra.mxu0 0.0
    %902 = vmatprep.subr.mxu0 0.0
    %903 = vmatpush1.msra.mxu0 0.0
    %904 = vmatprep.subr.mxu0 0.0
    %905 = vmatpush1.msra.mxu0 0.0
    %906 = vmatprep.subr.mxu0 0.0
    %907 = vmatpush1.msra.mxu0 0.0
    %908 = vmatprep.subr.mxu0 0.0
    %909 = vmatpush1.msra.mxu0 0.0
    %910 = vmatprep.subr.mxu0 0.0
    %911 = vmatpush1.msra.mxu0 0.0
    %912 = vmatprep.subr.mxu0 0.0
    %913 = vmatpush1.msra.mxu0 0.0
    %914 = vmatprep.subr.mxu0 0.0
    %915 = vmatpush1.msra.mxu0 0.0
    %916 = vmatprep.subr.mxu0 0.0
    %917 = vmatpush1.msra.mxu0 0.0
    %918 = vmatprep.subr.mxu0 0.0
    %919 = vmatpush1.msra.mxu0 0.0
    %920 = vmatprep.subr.mxu0 0.0
    %921 = vmatpush1.msra.mxu0 0.0
    %922 = vmatprep.subr.mxu0 0.0
    %923 = vmatpush1.msra.mxu0 0.0
    %924 = vmatprep.mubr.f32.mxu0 0.0
    %v925 = vand.u32 %v496, 4294901760
    %926 = vmatmul.mubr.f32.gmra.mrb[0].mxu0 %v925
    %v927 = vpop.f32.mrb[0].mxu0
    %v928 = vadd.f32 %v857, %v927
    %v929 = vpop.f32.mrb[0].mxu0
    %930 = vdwg.mxu0
    %s931 = scalar_lea.vmem [#allocation7], 8
    %v932 = vld [vmem:[%s931] sm:$0xff]
    %v933 = vmul.f32 %v932, %v52
    %v935 = vsel %vm55, %v933, 0
    %937 = vmatprep.subr.mxu0 0.0
    %938 = vmatpush1.msra.mxu0 1.0
    %939 = vmatprep.subr.mxu0 0.0
    %940 = vmatpush1.msra.mxu0 1.0
    %941 = vmatprep.subr.mxu0 0.0
    %942 = vmatpush1.msra.mxu0 1.0
    %943 = vmatprep.subr.mxu0 0.0
    %944 = vmatpush1.msra.mxu0 1.0
    %945 = vmatprep.subr.mxu0 0.0
    %946 = vmatpush1.msra.mxu0 0.0
    %947 = vmatprep.subr.mxu0 0.0
    %948 = vmatpush1.msra.mxu0 0.0
    %949 = vmatprep.subr.mxu0 0.0
    %950 = vmatpush1.msra.mxu0 0.0
    %951 = vmatprep.subr.mxu0 0.0
    %952 = vmatpush1.msra.mxu0 0.0
    %953 = vmatprep.subr.mxu0 0.0
    %954 = vmatpush1.msra.mxu0 0.0
    %955 = vmatprep.subr.mxu0 0.0
    %956 = vmatpush1.msra.mxu0 0.0
    %957 = vmatprep.subr.mxu0 0.0
    %958 = vmatpush1.msra.mxu0 0.0
    %959 = vmatprep.subr.mxu0 0.0
    %960 = vmatpush1.msra.mxu0 0.0
    %961 = vmatprep.subr.mxu0 0.0
    %962 = vmatpush1.msra.mxu0 0.0
    %963 = vmatprep.subr.mxu0 0.0
    %964 = vmatpush1.msra.mxu0 0.0
    %965 = vmatprep.subr.mxu0 0.0
    %966 = vmatpush1.msra.mxu0 0.0
    %967 = vmatprep.subr.mxu0 0.0
    %968 = vmatpush1.msra.mxu0 0.0
    %969 = vmatprep.subr.mxu0 0.0
    %970 = vmatpush1.msra.mxu0 0.0
    %971 = vmatprep.subr.mxu0 0.0
    %972 = vmatpush1.msra.mxu0 0.0
    %973 = vmatprep.subr.mxu0 0.0
    %974 = vmatpush1.msra.mxu0 0.0
    %975 = vmatprep.subr.mxu0 0.0
    %976 = vmatpush1.msra.mxu0 0.0
    %977 = vmatprep.subr.mxu0 0.0
    %978 = vmatpush1.msra.mxu0 0.0
    %979 = vmatprep.subr.mxu0 0.0
    %980 = vmatpush1.msra.mxu0 0.0
    %981 = vmatprep.subr.mxu0 0.0
    %982 = vmatpush1.msra.mxu0 0.0
    %983 = vmatprep.subr.mxu0 0.0
    %984 = vmatpush1.msra.mxu0 0.0
    %985 = vmatprep.subr.mxu0 0.0
    %986 = vmatpush1.msra.mxu0 0.0
    %987 = vmatprep.subr.mxu0 0.0
    %988 = vmatpush1.msra.mxu0 0.0
    %989 = vmatprep.subr.mxu0 0.0
    %990 = vmatpush1.msra.mxu0 0.0
    %991 = vmatprep.subr.mxu0 0.0
    %992 = vmatpush1.msra.mxu0 0.0
    %993 = vmatprep.subr.mxu0 0.0
    %994 = vmatpush1.msra.mxu0 0.0
    %995 = vmatprep.subr.mxu0 0.0
    %996 = vmatpush1.msra.mxu0 0.0
    %997 = vmatprep.subr.mxu0 0.0
    %998 = vmatpush1.msra.mxu0 0.0
    %999 = vmatprep.subr.mxu0 0.0
    %1000 = vmatpush1.msra.mxu0 0.0
    %1001 = vmatprep.mubr.f32.mxu0 0.0
    %v1002 = vand.u32 %v935, 4294901760
    %v1003 = vsub.f32 %v935, %v1002
    %v1004 = vand.u32 %v1003, 4294901760
    %v1005 = vsub.f32 %v1003, %v1004
    %v1006 = vand.u32 %v1005, 4294901760
    %1007 = vmatmul.mubr.f32.gmra.mrb[0].mxu0 %v1006
    %v1008 = vpop.f32.mrb[0].mxu0
    %v1009 = vadd.f32 0.0, %v1008
    %v1010 = vpop.f32.mrb[0].mxu0
    %1011 = vdwg.mxu0
    %1012 = vmatprep.subr.mxu0 0.0
    %1013 = vmatpush1.msra.mxu0 0.0
    %1014 = vmatprep.subr.mxu0 0.0
    %1015 = vmatpush1.msra.mxu0 0.0
    %1016 = vmatprep.subr.mxu0 0.0
    %1017 = vmatpush1.msra.mxu0 0.0
    %1018 = vmatprep.subr.mxu0 0.0
    %1019 = vmatpush1.msra.mxu0 0.0
    %1020 = vmatprep.subr.mxu0 0.0
    %1021 = vmatpush1.msra.mxu0 0.0
    %1022 = vmatprep.subr.mxu0 0.0
    %1023 = vmatpush1.msra.mxu0 0.0
    %1024 = vmatprep.subr.mxu0 0.0
    %1025 = vmatpush1.msra.mxu0 0.0
    %1026 = vmatprep.subr.mxu0 0.0
    %1027 = vmatpush1.msra.mxu0 0.0
    %1028 = vmatprep.subr.mxu0 0.0
    %1029 = vmatpush1.msra.mxu0 0.0
    %1030 = vmatprep.subr.mxu0 0.0
    %1031 = vmatpush1.msra.mxu0 0.0
    %1032 = vmatprep.subr.mxu0 0.0
    %1033 = vmatpush1.msra.mxu0 0.0
    %1034 = vmatprep.subr.mxu0 0.0
    %1035 = vmatpush1.msra.mxu0 0.0
    %1036 = vmatprep.subr.mxu0 0.0
    %1037 = vmatpush1.msra.mxu0 0.0
    %1038 = vmatprep.subr.mxu0 0.0
    %1039 = vmatpush1.msra.mxu0 0.0
    %1040 = vmatprep.subr.mxu0 0.0
    %1041 = vmatpush1.msra.mxu0 0.0
    %1042 = vmatprep.subr.mxu0 0.0
    %1043 = vmatpush1.msra.mxu0 0.0
    %1044 = vmatprep.subr.mxu0 0.0
    %1045 = vmatpush1.msra.mxu0 0.0
    %1046 = vmatprep.subr.mxu0 0.0
    %1047 = vmatpush1.msra.mxu0 0.0
    %1048 = vmatprep.subr.mxu0 0.0
    %1049 = vmatpush1.msra.mxu0 0.0
    %1050 = vmatprep.subr.mxu0 0.0
    %1051 = vmatpush1.msra.mxu0 0.0
    %1052 = vmatprep.subr.mxu0 0.0
    %1053 = vmatpush1.msra.mxu0 0.0
    %1054 = vmatprep.subr.mxu0 0.0
    %1055 = vmatpush1.msra.mxu0 0.0
    %1056 = vmatprep.subr.mxu0 0.0
    %1057 = vmatpush1.msra.mxu0 0.0
    %1058 = vmatprep.subr.mxu0 0.0
    %1059 = vmatpush1.msra.mxu0 0.0
    %1060 = vmatprep.subr.mxu0 0.0
    %1061 = vmatpush1.msra.mxu0 0.0
    %1062 = vmatprep.subr.mxu0 0.0
    %1063 = vmatpush1.msra.mxu0 0.0
    %1064 = vmatprep.subr.mxu0 0.0
    %1065 = vmatpush1.msra.mxu0 0.0
    %1066 = vmatprep.subr.mxu0 0.0
    %1067 = vmatpush1.msra.mxu0 0.0
    %1068 = vmatprep.subr.mxu0 0.0
    %1069 = vmatpush1.msra.mxu0 0.0
    %1070 = vmatprep.subr.mxu0 0.0
    %1071 = vmatpush1.msra.mxu0 0.0
    %1072 = vmatprep.subr.mxu0 0.0
    %1073 = vmatpush1.msra.mxu0 0.0
    %1074 = vmatprep.subr.mxu0 0.0
    %1075 = vmatpush1.msra.mxu0 0.0
    %1076 = vmatprep.mubr.f32.mxu0 0.0
    %v1077 = vand.u32 %v935, 4294901760
    %1078 = vmatmul.mubr.f32.gmra.mrb[0].mxu0 %v1077
    %v1079 = vpop.f32.mrb[0].mxu0
    %v1080 = vadd.f32 %v1009, %v1079
    %v1081 = vpop.f32.mrb[0].mxu0
    %1082 = vdwg.mxu0
    %1083 = vmatprep.subr.mxu0 0.0
    %1084 = vmatpush1.msra.mxu0 0.0
    %1085 = vmatprep.subr.mxu0 0.0
    %1086 = vmatpush1.msra.mxu0 0.0
    %1087 = vmatprep.subr.mxu0 0.0
    %1088 = vmatpush1.msra.mxu0 0.0
    %1089 = vmatprep.subr.mxu0 0.0
    %1090 = vmatpush1.msra.mxu0 0.0
    %1091 = vmatprep.subr.mxu0 0.0
    %1092 = vmatpush1.msra.mxu0 0.0
    %1093 = vmatprep.subr.mxu0 0.0
    %1094 = vmatpush1.msra.mxu0 0.0
    %1095 = vmatprep.subr.mxu0 0.0
    %1096 = vmatpush1.msra.mxu0 0.0
    %1097 = vmatprep.subr.mxu0 0.0
    %1098 = vmatpush1.msra.mxu0 0.0
    %1099 = vmatprep.subr.mxu0 0.0
    %1100 = vmatpush1.msra.mxu0 0.0
    %1101 = vmatprep.subr.mxu0 0.0
    %1102 = vmatpush1.msra.mxu0 0.0
    %1103 = vmatprep.subr.mxu0 0.0
    %1104 = vmatpush1.msra.mxu0 0.0
    %1105 = vmatprep.subr.mxu0 0.0
    %1106 = vmatpush1.msra.mxu0 0.0
    %1107 = vmatprep.subr.mxu0 0.0
    %1108 = vmatpush1.msra.mxu0 0.0
    %1109 = vmatprep.subr.mxu0 0.0
    %1110 = vmatpush1.msra.mxu0 0.0
    %1111 = vmatprep.subr.mxu0 0.0
    %1112 = vmatpush1.msra.mxu0 0.0
    %1113 = vmatprep.subr.mxu0 0.0
    %1114 = vmatpush1.msra.mxu0 0.0
    %1115 = vmatprep.subr.mxu0 0.0
    %1116 = vmatpush1.msra.mxu0 0.0
    %1117 = vmatprep.subr.mxu0 0.0
    %1118 = vmatpush1.msra.mxu0 0.0
    %1119 = vmatprep.subr.mxu0 0.0
    %1120 = vmatpush1.msra.mxu0 0.0
    %1121 = vmatprep.subr.mxu0 0.0
    %1122 = vmatpush1.msra.mxu0 0.0
    %1123 = vmatprep.subr.mxu0 0.0
    %1124 = vmatpush1.msra.mxu0 0.0
    %1125 = vmatprep.subr.mxu0 0.0
    %1126 = vmatpush1.msra.mxu0 0.0
    %1127 = vmatprep.subr.mxu0 0.0
    %1128 = vmatpush1.msra.mxu0 0.0
    %1129 = vmatprep.subr.mxu0 0.0
    %1130 = vmatpush1.msra.mxu0 0.0
    %1131 = vmatprep.subr.mxu0 0.0
    %1132 = vmatpush1.msra.mxu0 0.0
    %1133 = vmatprep.subr.mxu0 0.0
    %1134 = vmatpush1.msra.mxu0 0.0
    %1135 = vmatprep.subr.mxu0 0.0
    %1136 = vmatpush1.msra.mxu0 0.0
    %1137 = vmatprep.subr.mxu0 0.0
    %1138 = vmatpush1.msra.mxu0 0.0
    %1139 = vmatprep.subr.mxu0 0.0
    %1140 = vmatpush1.msra.mxu0 0.0
    %1141 = vmatprep.subr.mxu0 0.0
    %1142 = vmatpush1.msra.mxu0 0.0
    %1143 = vmatprep.subr.mxu0 0.0
    %1144 = vmatpush1.msra.mxu0 0.0
    %1145 = vmatprep.subr.mxu0 0.0
    %1146 = vmatpush1.msra.mxu0 0.0
    %1147 = vmatprep.mubr.f32.mxu0 0.0
    %v1148 = vand.u32 %v935, 4294901760
    %v1149 = vsub.f32 %v935, %v1148
    %1150 = vmatmul.mubr.f32.gmra.mrb[0].mxu0 %v1149
    %v1151 = vpop.f32.mrb[0].mxu0
    %v1152 = vadd.f32 %v1080, %v1151
    %v1153 = vpop.f32.mrb[0].mxu0
    %1154 = vdwg.mxu0
    %1155 = vmatprep.subr.mxu0 0.0
    %1156 = vmatpush1.msra.mxu0 1.0
    %1157 = vmatprep.subr.mxu0 0.0
    %1158 = vmatpush1.msra.mxu0 1.0
    %1159 = vmatprep.subr.mxu0 0.0
    %1160 = vmatpush1.msra.mxu0 1.0
    %1161 = vmatprep.subr.mxu0 0.0
    %1162 = vmatpush1.msra.mxu0 1.0
    %1163 = vmatprep.subr.mxu0 0.0
    %1164 = vmatpush1.msra.mxu0 0.0
    %1165 = vmatprep.subr.mxu0 0.0
    %1166 = vmatpush1.msra.mxu0 0.0
    %1167 = vmatprep.subr.mxu0 0.0
    %1168 = vmatpush1.msra.mxu0 0.0
    %1169 = vmatprep.subr.mxu0 0.0
    %1170 = vmatpush1.msra.mxu0 0.0
    %1171 = vmatprep.subr.mxu0 0.0
    %1172 = vmatpush1.msra.mxu0 0.0
    %1173 = vmatprep.subr.mxu0 0.0
    %1174 = vmatpush1.msra.mxu0 0.0
    %1175 = vmatprep.subr.mxu0 0.0
    %1176 = vmatpush1.msra.mxu0 0.0
    %1177 = vmatprep.subr.mxu0 0.0
    %1178 = vmatpush1.msra.mxu0 0.0
    %1179 = vmatprep.subr.mxu0 0.0
    %1180 = vmatpush1.msra.mxu0 0.0
    %1181 = vmatprep.subr.mxu0 0.0
    %1182 = vmatpush1.msra.mxu0 0.0
    %1183 = vmatprep.subr.mxu0 0.0
    %1184 = vmatpush1.msra.mxu0 0.0
    %1185 = vmatprep.subr.mxu0 0.0
    %1186 = vmatpush1.msra.mxu0 0.0
    %1187 = vmatprep.subr.mxu0 0.0
    %1188 = vmatpush1.msra.mxu0 0.0
    %1189 = vmatprep.subr.mxu0 0.0
    %1190 = vmatpush1.msra.mxu0 0.0
    %1191 = vmatprep.subr.mxu0 0.0
    %1192 = vmatpush1.msra.mxu0 0.0
    %1193 = vmatprep.subr.mxu0 0.0
    %1194 = vmatpush1.msra.mxu0 0.0
    %1195 = vmatprep.subr.mxu0 0.0
    %1196 = vmatpush1.msra.mxu0 0.0
    %1197 = vmatprep.subr.mxu0 0.0
    %1198 = vmatpush1.msra.mxu0 0.0
    %1199 = vmatprep.subr.mxu0 0.0
    %1200 = vmatpush1.msra.mxu0 0.0
    %1201 = vmatprep.subr.mxu0 0.0
    %1202 = vmatpush1.msra.mxu0 0.0
    %1203 = vmatprep.subr.mxu0 0.0
    %1204 = vmatpush1.msra.mxu0 0.0
    %1205 = vmatprep.subr.mxu0 0.0
    %1206 = vmatpush1.msra.mxu0 0.0
    %1207 = vmatprep.subr.mxu0 0.0
    %1208 = vmatpush1.msra.mxu0 0.0
    %1209 = vmatprep.subr.mxu0 0.0
    %1210 = vmatpush1.msra.mxu0 0.0
    %1211 = vmatprep.subr.mxu0 0.0
    %1212 = vmatpush1.msra.mxu0 0.0
    %1213 = vmatprep.subr.mxu0 0.0
    %1214 = vmatpush1.msra.mxu0 0.0
    %1215 = vmatprep.subr.mxu0 0.0
    %1216 = vmatpush1.msra.mxu0 0.0
    %1217 = vmatprep.subr.mxu0 0.0
    %1218 = vmatpush1.msra.mxu0 0.0
    %1219 = vmatprep.mubr.f32.mxu0 0.0
    %v1220 = vand.u32 %v935, 4294901760
    %v1221 = vsub.f32 %v935, %v1220
    %v1222 = vand.u32 %v1221, 4294901760
    %1223 = vmatmul.mubr.f32.gmra.mrb[0].mxu0 %v1222
    %v1224 = vpop.f32.mrb[0].mxu0
    %v1225 = vadd.f32 %v1152, %v1224
    %v1226 = vpop.f32.mrb[0].mxu0
    %1227 = vdwg.mxu0
    %1228 = vmatprep.subr.mxu0 0.0
    %1229 = vmatpush1.msra.mxu0 0.0
    %1230 = vmatprep.subr.mxu0 0.0
    %1231 = vmatpush1.msra.mxu0 0.0
    %1232 = vmatprep.subr.mxu0 0.0
    %1233 = vmatpush1.msra.mxu0 0.0
    %1234 = vmatprep.subr.mxu0 0.0
    %1235 = vmatpush1.msra.mxu0 0.0
    %1236 = vmatprep.subr.mxu0 0.0
    %1237 = vmatpush1.msra.mxu0 0.0
    %1238 = vmatprep.subr.mxu0 0.0
    %1239 = vmatpush1.msra.mxu0 0.0
    %1240 = vmatprep.subr.mxu0 0.0
    %1241 = vmatpush1.msra.mxu0 0.0
    %1242 = vmatprep.subr.mxu0 0.0
    %1243 = vmatpush1.msra.mxu0 0.0
    %1244 = vmatprep.subr.mxu0 0.0
    %1245 = vmatpush1.msra.mxu0 0.0
    %1246 = vmatprep.subr.mxu0 0.0
    %1247 = vmatpush1.msra.mxu0 0.0
    %1248 = vmatprep.subr.mxu0 0.0
    %1249 = vmatpush1.msra.mxu0 0.0
    %1250 = vmatprep.subr.mxu0 0.0
    %1251 = vmatpush1.msra.mxu0 0.0
    %1252 = vmatprep.subr.mxu0 0.0
    %1253 = vmatpush1.msra.mxu0 0.0
    %1254 = vmatprep.subr.mxu0 0.0
    %1255 = vmatpush1.msra.mxu0 0.0
    %1256 = vmatprep.subr.mxu0 0.0
    %1257 = vmatpush1.msra.mxu0 0.0
    %1258 = vmatprep.subr.mxu0 0.0
    %1259 = vmatpush1.msra.mxu0 0.0
    %1260 = vmatprep.subr.mxu0 0.0
    %1261 = vmatpush1.msra.mxu0 0.0
    %1262 = vmatprep.subr.mxu0 0.0
    %1263 = vmatpush1.msra.mxu0 0.0
    %1264 = vmatprep.subr.mxu0 0.0
    %1265 = vmatpush1.msra.mxu0 0.0
    %1266 = vmatprep.subr.mxu0 0.0
    %1267 = vmatpush1.msra.mxu0 0.0
    %1268 = vmatprep.subr.mxu0 0.0
    %1269 = vmatpush1.msra.mxu0 0.0
    %1270 = vmatprep.subr.mxu0 0.0
    %1271 = vmatpush1.msra.mxu0 0.0
    %1272 = vmatprep.subr.mxu0 0.0
    %1273 = vmatpush1.msra.mxu0 0.0
    %1274 = vmatprep.subr.mxu0 0.0
    %1275 = vmatpush1.msra.mxu0 0.0
    %1276 = vmatprep.subr.mxu0 0.0
    %1277 = vmatpush1.msra.mxu0 0.0
    %1278 = vmatprep.subr.mxu0 0.0
    %1279 = vmatpush1.msra.mxu0 0.0
    %1280 = vmatprep.subr.mxu0 0.0
    %1281 = vmatpush1.msra.mxu0 0.0
    %1282 = vmatprep.subr.mxu0 0.0
    %1283 = vmatpush1.msra.mxu0 0.0
    %1284 = vmatprep.subr.mxu0 0.0
    %1285 = vmatpush1.msra.mxu0 0.0
    %1286 = vmatprep.subr.mxu0 0.0
    %1287 = vmatpush1.msra.mxu0 0.0
    %1288 = vmatprep.subr.mxu0 0.0
    %1289 = vmatpush1.msra.mxu0 0.0
    %1290 = vmatprep.subr.mxu0 0.0
    %1291 = vmatpush1.msra.mxu0 0.0
    %1292 = vmatprep.mubr.f32.mxu0 0.0
    %v1293 = vand.u32 %v935, 4294901760
    %1294 = vmatmul.mubr.f32.gmra.mrb[0].mxu0 %v1293
    %v1295 = vpop.f32.mrb[0].mxu0
    %v1296 = vadd.f32 %v1225, %v1295
    %v1297 = vpop.f32.mrb[0].mxu0
    %1298 = vdwg.mxu0
    %1299 = vmatprep.subr.mxu0 0.0
    %1300 = vmatpush1.msra.mxu0 1.0
    %1301 = vmatprep.subr.mxu0 0.0
    %1302 = vmatpush1.msra.mxu0 1.0
    %1303 = vmatprep.subr.mxu0 0.0
    %1304 = vmatpush1.msra.mxu0 1.0
    %1305 = vmatprep.subr.mxu0 0.0
    %1306 = vmatpush1.msra.mxu0 1.0
    %1307 = vmatprep.subr.mxu0 0.0
    %1308 = vmatpush1.msra.mxu0 0.0
    %1309 = vmatprep.subr.mxu0 0.0
    %1310 = vmatpush1.msra.mxu0 0.0
    %1311 = vmatprep.subr.mxu0 0.0
    %1312 = vmatpush1.msra.mxu0 0.0
    %1313 = vmatprep.subr.mxu0 0.0
    %1314 = vmatpush1.msra.mxu0 0.0
    %1315 = vmatprep.subr.mxu0 0.0
    %1316 = vmatpush1.msra.mxu0 0.0
    %1317 = vmatprep.subr.mxu0 0.0
    %1318 = vmatpush1.msra.mxu0 0.0
    %1319 = vmatprep.subr.mxu0 0.0
    %1320 = vmatpush1.msra.mxu0 0.0
    %1321 = vmatprep.subr.mxu0 0.0
    %1322 = vmatpush1.msra.mxu0 0.0
    %1323 = vmatprep.subr.mxu0 0.0
    %1324 = vmatpush1.msra.mxu0 0.0
    %1325 = vmatprep.subr.mxu0 0.0
    %1326 = vmatpush1.msra.mxu0 0.0
    %1327 = vmatprep.subr.mxu0 0.0
    %1328 = vmatpush1.msra.mxu0 0.0
    %1329 = vmatprep.subr.mxu0 0.0
    %1330 = vmatpush1.msra.mxu0 0.0
    %1331 = vmatprep.subr.mxu0 0.0
    %1332 = vmatpush1.msra.mxu0 0.0
    %1333 = vmatprep.subr.mxu0 0.0
    %1334 = vmatpush1.msra.mxu0 0.0
    %1335 = vmatprep.subr.mxu0 0.0
    %1336 = vmatpush1.msra.mxu0 0.0
    %1337 = vmatprep.subr.mxu0 0.0
    %1338 = vmatpush1.msra.mxu0 0.0
    %1339 = vmatprep.subr.mxu0 0.0
    %1340 = vmatpush1.msra.mxu0 0.0
    %1341 = vmatprep.subr.mxu0 0.0
    %1342 = vmatpush1.msra.mxu0 0.0
    %1343 = vmatprep.subr.mxu0 0.0
    %1344 = vmatpush1.msra.mxu0 0.0
    %1345 = vmatprep.subr.mxu0 0.0
    %1346 = vmatpush1.msra.mxu0 0.0
    %1347 = vmatprep.subr.mxu0 0.0
    %1348 = vmatpush1.msra.mxu0 0.0
    %1349 = vmatprep.subr.mxu0 0.0
    %1350 = vmatpush1.msra.mxu0 0.0
    %1351 = vmatprep.subr.mxu0 0.0
    %1352 = vmatpush1.msra.mxu0 0.0
    %1353 = vmatprep.subr.mxu0 0.0
    %1354 = vmatpush1.msra.mxu0 0.0
    %1355 = vmatprep.subr.mxu0 0.0
    %1356 = vmatpush1.msra.mxu0 0.0
    %1357 = vmatprep.subr.mxu0 0.0
    %1358 = vmatpush1.msra.mxu0 0.0
    %1359 = vmatprep.subr.mxu0 0.0
    %1360 = vmatpush1.msra.mxu0 0.0
    %1361 = vmatprep.subr.mxu0 0.0
    %1362 = vmatpush1.msra.mxu0 0.0
    %1363 = vmatprep.mubr.f32.mxu0 0.0
    %v1364 = vand.u32 %v935, 4294901760
    %1365 = vmatmul.mubr.f32.gmra.mrb[0].mxu0 %v1364
    %v1366 = vpop.f32.mrb[0].mxu0
    %v1367 = vadd.f32 %v1296, %v1366
    %v1368 = vpop.f32.mrb[0].mxu0
    %1369 = vdwg.mxu0
    %s1370 = scalar_lea.vmem [#allocation7], 16
    %v1371 = vld [vmem:[%s1370] sm:$0xff]
    %v1372 = vmul.f32 %v1371, %v52
    %v1374 = vsel %vm55, %v1372, 0
    %1376 = vmatprep.subr.mxu0 0.0
    %1377 = vmatpush1.msra.mxu0 1.0
    %1378 = vmatprep.subr.mxu0 0.0
    %1379 = vmatpush1.msra.mxu0 1.0
    %1380 = vmatprep.subr.mxu0 0.0
    %1381 = vmatpush1.msra.mxu0 1.0
    %1382 = vmatprep.subr.mxu0 0.0
    %1383 = vmatpush1.msra.mxu0 1.0
    %1384 = vmatprep.subr.mxu0 0.0
    %1385 = vmatpush1.msra.mxu0 0.0
    %1386 = vmatprep.subr.mxu0 0.0
    %1387 = vmatpush1.msra.mxu0 0.0
    %1388 = vmatprep.subr.mxu0 0.0
    %1389 = vmatpush1.msra.mxu0 0.0
    %1390 = vmatprep.subr.mxu0 0.0
    %1391 = vmatpush1.msra.mxu0 0.0
    %1392 = vmatprep.subr.mxu0 0.0
    %1393 = vmatpush1.msra.mxu0 0.0
    %1394 = vmatprep.subr.mxu0 0.0
    %1395 = vmatpush1.msra.mxu0 0.0
    %1396 = vmatprep.subr.mxu0 0.0
    %1397 = vmatpush1.msra.mxu0 0.0
    %1398 = vmatprep.subr.mxu0 0.0
    %1399 = vmatpush1.msra.mxu0 0.0
    %1400 = vmatprep.subr.mxu0 0.0
    %1401 = vmatpush1.msra.mxu0 0.0
    %1402 = vmatprep.subr.mxu0 0.0
    %1403 = vmatpush1.msra.mxu0 0.0
    %1404 = vmatprep.subr.mxu0 0.0
    %1405 = vmatpush1.msra.mxu0 0.0
    %1406 = vmatprep.subr.mxu0 0.0
    %1407 = vmatpush1.msra.mxu0 0.0
    %1408 = vmatprep.subr.mxu0 0.0
    %1409 = vmatpush1.msra.mxu0 0.0
    %1410 = vmatprep.subr.mxu0 0.0
    %1411 = vmatpush1.msra.mxu0 0.0
    %1412 = vmatprep.subr.mxu0 0.0
    %1413 = vmatpush1.msra.mxu0 0.0
    %1414 = vmatprep.subr.mxu0 0.0
    %1415 = vmatpush1.msra.mxu0 0.0
    %1416 = vmatprep.subr.mxu0 0.0
    %1417 = vmatpush1.msra.mxu0 0.0
    %1418 = vmatprep.subr.mxu0 0.0
    %1419 = vmatpush1.msra.mxu0 0.0
    %1420 = vmatprep.subr.mxu0 0.0
    %1421 = vmatpush1.msra.mxu0 0.0
    %1422 = vmatprep.subr.mxu0 0.0
    %1423 = vmatpush1.msra.mxu0 0.0
    %1424 = vmatprep.subr.mxu0 0.0
    %1425 = vmatpush1.msra.mxu0 0.0
    %1426 = vmatprep.subr.mxu0 0.0
    %1427 = vmatpush1.msra.mxu0 0.0
    %1428 = vmatprep.subr.mxu0 0.0
    %1429 = vmatpush1.msra.mxu0 0.0
    %1430 = vmatprep.subr.mxu0 0.0
    %1431 = vmatpush1.msra.mxu0 0.0
    %1432 = vmatprep.subr.mxu0 0.0
    %1433 = vmatpush1.msra.mxu0 0.0
    %1434 = vmatprep.subr.mxu0 0.0
    %1435 = vmatpush1.msra.mxu0 0.0
    %1436 = vmatprep.subr.mxu0 0.0
    %1437 = vmatpush1.msra.mxu0 0.0
    %1438 = vmatprep.subr.mxu0 0.0
    %1439 = vmatpush1.msra.mxu0 0.0
    %1440 = vmatprep.mubr.f32.mxu0 0.0
    %v1441 = vand.u32 %v1374, 4294901760
    %v1442 = vsub.f32 %v1374, %v1441
    %v1443 = vand.u32 %v1442, 4294901760
    %v1444 = vsub.f32 %v1442, %v1443
    %v1445 = vand.u32 %v1444, 4294901760
    %1446 = vmatmul.mubr.f32.gmra.mrb[0].mxu0 %v1445
    %v1447 = vpop.f32.mrb[0].mxu0
    %v1448 = vadd.f32 0.0, %v1447
    %v1449 = vpop.f32.mrb[0].mxu0
    %1450 = vdwg.mxu0
    %1451 = vmatprep.subr.mxu0 0.0
    %1452 = vmatpush1.msra.mxu0 0.0
    %1453 = vmatprep.subr.mxu0 0.0
    %1454 = vmatpush1.msra.mxu0 0.0
    %1455 = vmatprep.subr.mxu0 0.0
    %1456 = vmatpush1.msra.mxu0 0.0
    %1457 = vmatprep.subr.mxu0 0.0
    %1458 = vmatpush1.msra.mxu0 0.0
    %1459 = vmatprep.subr.mxu0 0.0
    %1460 = vmatpush1.msra.mxu0 0.0
    %1461 = vmatprep.subr.mxu0 0.0
    %1462 = vmatpush1.msra.mxu0 0.0
    %1463 = vmatprep.subr.mxu0 0.0
    %1464 = vmatpush1.msra.mxu0 0.0
    %1465 = vmatprep.subr.mxu0 0.0
    %1466 = vmatpush1.msra.mxu0 0.0
    %1467 = vmatprep.subr.mxu0 0.0
    %1468 = vmatpush1.msra.mxu0 0.0
    %1469 = vmatprep.subr.mxu0 0.0
    %1470 = vmatpush1.msra.mxu0 0.0
    %1471 = vmatprep.subr.mxu0 0.0
    %1472 = vmatpush1.msra.mxu0 0.0
    %1473 = vmatprep.subr.mxu0 0.0
    %1474 = vmatpush1.msra.mxu0 0.0
    %1475 = vmatprep.subr.mxu0 0.0
    %1476 = vmatpush1.msra.mxu0 0.0
    %1477 = vmatprep.subr.mxu0 0.0
    %1478 = vmatpush1.msra.mxu0 0.0
    %1479 = vmatprep.subr.mxu0 0.0
    %1480 = vmatpush1.msra.mxu0 0.0
    %1481 = vmatprep.subr.mxu0 0.0
    %1482 = vmatpush1.msra.mxu0 0.0
    %1483 = vmatprep.subr.mxu0 0.0
    %1484 = vmatpush1.msra.mxu0 0.0
    %1485 = vmatprep.subr.mxu0 0.0
    %1486 = vmatpush1.msra.mxu0 0.0
    %1487 = vmatprep.subr.mxu0 0.0
    %1488 = vmatpush1.msra.mxu0 0.0
    %1489 = vmatprep.subr.mxu0 0.0
    %1490 = vmatpush1.msra.mxu0 0.0
    %1491 = vmatprep.subr.mxu0 0.0
    %1492 = vmatpush1.msra.mxu0 0.0
    %1493 = vmatprep.subr.mxu0 0.0
    %1494 = vmatpush1.msra.mxu0 0.0
    %1495 = vmatprep.subr.mxu0 0.0
    %1496 = vmatpush1.msra.mxu0 0.0
    %1497 = vmatprep.subr.mxu0 0.0
    %1498 = vmatpush1.msra.mxu0 0.0
    %1499 = vmatprep.subr.mxu0 0.0
    %1500 = vmatpush1.msra.mxu0 0.0
    %1501 = vmatprep.subr.mxu0 0.0
    %1502 = vmatpush1.msra.mxu0 0.0
    %1503 = vmatprep.subr.mxu0 0.0
    %1504 = vmatpush1.msra.mxu0 0.0
    %1505 = vmatprep.subr.mxu0 0.0
    %1506 = vmatpush1.msra.mxu0 0.0
    %1507 = vmatprep.subr.mxu0 0.0
    %1508 = vmatpush1.msra.mxu0 0.0
    %1509 = vmatprep.subr.mxu0 0.0
    %1510 = vmatpush1.msra.mxu0 0.0
    %1511 = vmatprep.subr.mxu0 0.0
    %1512 = vmatpush1.msra.mxu0 0.0
    %1513 = vmatprep.subr.mxu0 0.0
    %1514 = vmatpush1.msra.mxu0 0.0
    %1515 = vmatprep.mubr.f32.mxu0 0.0
    %v1516 = vand.u32 %v1374, 4294901760
    %1517 = vmatmul.mubr.f32.gmra.mrb[0].mxu0 %v1516
    %v1518 = vpop.f32.mrb[0].mxu0
    %v1519 = vadd.f32 %v1448, %v1518
    %v1520 = vpop.f32.mrb[0].mxu0
    %1521 = vdwg.mxu0
    %1522 = vmatprep.subr.mxu0 0.0
    %1523 = vmatpush1.msra.mxu0 0.0
    %1524 = vmatprep.subr.mxu0 0.0
    %1525 = vmatpush1.msra.mxu0 0.0
    %1526 = vmatprep.subr.mxu0 0.0
    %1527 = vmatpush1.msra.mxu0 0.0
    %1528 = vmatprep.subr.mxu0 0.0
    %1529 = vmatpush1.msra.mxu0 0.0
    %1530 = vmatprep.subr.mxu0 0.0
    %1531 = vmatpush1.msra.mxu0 0.0
    %1532 = vmatprep.subr.mxu0 0.0
    %1533 = vmatpush1.msra.mxu0 0.0
    %1534 = vmatprep.subr.mxu0 0.0
    %1535 = vmatpush1.msra.mxu0 0.0
    %1536 = vmatprep.subr.mxu0 0.0
    %1537 = vmatpush1.msra.mxu0 0.0
    %1538 = vmatprep.subr.mxu0 0.0
    %1539 = vmatpush1.msra.mxu0 0.0
    %1540 = vmatprep.subr.mxu0 0.0
    %1541 = vmatpush1.msra.mxu0 0.0
    %1542 = vmatprep.subr.mxu0 0.0
    %1543 = vmatpush1.msra.mxu0 0.0
    %1544 = vmatprep.subr.mxu0 0.0
    %1545 = vmatpush1.msra.mxu0 0.0
    %1546 = vmatprep.subr.mxu0 0.0
    %1547 = vmatpush1.msra.mxu0 0.0
    %1548 = vmatprep.subr.mxu0 0.0
    %1549 = vmatpush1.msra.mxu0 0.0
    %1550 = vmatprep.subr.mxu0 0.0
    %1551 = vmatpush1.msra.mxu0 0.0
    %1552 = vmatprep.subr.mxu0 0.0
    %1553 = vmatpush1.msra.mxu0 0.0
    %1554 = vmatprep.subr.mxu0 0.0
    %1555 = vmatpush1.msra.mxu0 0.0
    %1556 = vmatprep.subr.mxu0 0.0
    %1557 = vmatpush1.msra.mxu0 0.0
    %1558 = vmatprep.subr.mxu0 0.0
    %1559 = vmatpush1.msra.mxu0 0.0
    %1560 = vmatprep.subr.mxu0 0.0
    %1561 = vmatpush1.msra.mxu0 0.0
    %1562 = vmatprep.subr.mxu0 0.0
    %1563 = vmatpush1.msra.mxu0 0.0
    %1564 = vmatprep.subr.mxu0 0.0
    %1565 = vmatpush1.msra.mxu0 0.0
    %1566 = vmatprep.subr.mxu0 0.0
    %1567 = vmatpush1.msra.mxu0 0.0
    %1568 = vmatprep.subr.mxu0 0.0
    %1569 = vmatpush1.msra.mxu0 0.0
    %1570 = vmatprep.subr.mxu0 0.0
    %1571 = vmatpush1.msra.mxu0 0.0
    %1572 = vmatprep.subr.mxu0 0.0
    %1573 = vmatpush1.msra.mxu0 0.0
    %1574 = vmatprep.subr.mxu0 0.0
    %1575 = vmatpush1.msra.mxu0 0.0
    %1576 = vmatprep.subr.mxu0 0.0
    %1577 = vmatpush1.msra.mxu0 0.0
    %1578 = vmatprep.subr.mxu0 0.0
    %1579 = vmatpush1.msra.mxu0 0.0
    %1580 = vmatprep.subr.mxu0 0.0
    %1581 = vmatpush1.msra.mxu0 0.0
    %1582 = vmatprep.subr.mxu0 0.0
    %1583 = vmatpush1.msra.mxu0 0.0
    %1584 = vmatprep.subr.mxu0 0.0
    %1585 = vmatpush1.msra.mxu0 0.0
    %1586 = vmatprep.mubr.f32.mxu0 0.0
    %v1587 = vand.u32 %v1374, 4294901760
    %v1588 = vsub.f32 %v1374, %v1587
    %1589 = vmatmul.mubr.f32.gmra.mrb[0].mxu0 %v1588
    %v1590 = vpop.f32.mrb[0].mxu0
    %v1591 = vadd.f32 %v1519, %v1590
    %v1592 = vpop.f32.mrb[0].mxu0
    %1593 = vdwg.mxu0
    %1594 = vmatprep.subr.mxu0 0.0
    %1595 = vmatpush1.msra.mxu0 1.0
    %1596 = vmatprep.subr.mxu0 0.0
    %1597 = vmatpush1.msra.mxu0 1.0
    %1598 = vmatprep.subr.mxu0 0.0
    %1599 = vmatpush1.msra.mxu0 1.0
    %1600 = vmatprep.subr.mxu0 0.0
    %1601 = vmatpush1.msra.mxu0 1.0
    %1602 = vmatprep.subr.mxu0 0.0
    %1603 = vmatpush1.msra.mxu0 0.0
    %1604 = vmatprep.subr.mxu0 0.0
    %1605 = vmatpush1.msra.mxu0 0.0
    %1606 = vmatprep.subr.mxu0 0.0
    %1607 = vmatpush1.msra.mxu0 0.0
    %1608 = vmatprep.subr.mxu0 0.0
    %1609 = vmatpush1.msra.mxu0 0.0
    %1610 = vmatprep.subr.mxu0 0.0
    %1611 = vmatpush1.msra.mxu0 0.0
    %1612 = vmatprep.subr.mxu0 0.0
    %1613 = vmatpush1.msra.mxu0 0.0
    %1614 = vmatprep.subr.mxu0 0.0
    %1615 = vmatpush1.msra.mxu0 0.0
    %1616 = vmatprep.subr.mxu0 0.0
    %1617 = vmatpush1.msra.mxu0 0.0
    %1618 = vmatprep.subr.mxu0 0.0
    %1619 = vmatpush1.msra.mxu0 0.0
    %1620 = vmatprep.subr.mxu0 0.0
    %1621 = vmatpush1.msra.mxu0 0.0
    %1622 = vmatprep.subr.mxu0 0.0
    %1623 = vmatpush1.msra.mxu0 0.0
    %1624 = vmatprep.subr.mxu0 0.0
    %1625 = vmatpush1.msra.mxu0 0.0
    %1626 = vmatprep.subr.mxu0 0.0
    %1627 = vmatpush1.msra.mxu0 0.0
    %1628 = vmatprep.subr.mxu0 0.0
    %1629 = vmatpush1.msra.mxu0 0.0
    %1630 = vmatprep.subr.mxu0 0.0
    %1631 = vmatpush1.msra.mxu0 0.0
    %1632 = vmatprep.subr.mxu0 0.0
    %1633 = vmatpush1.msra.mxu0 0.0
    %1634 = vmatprep.subr.mxu0 0.0
    %1635 = vmatpush1.msra.mxu0 0.0
    %1636 = vmatprep.subr.mxu0 0.0
    %1637 = vmatpush1.msra.mxu0 0.0
    %1638 = vmatprep.subr.mxu0 0.0
    %1639 = vmatpush1.msra.mxu0 0.0
    %1640 = vmatprep.subr.mxu0 0.0
    %1641 = vmatpush1.msra.mxu0 0.0
    %1642 = vmatprep.subr.mxu0 0.0
    %1643 = vmatpush1.msra.mxu0 0.0
    %1644 = vmatprep.subr.mxu0 0.0
    %1645 = vmatpush1.msra.mxu0 0.0
    %1646 = vmatprep.subr.mxu0 0.0
    %1647 = vmatpush1.msra.mxu0 0.0
    %1648 = vmatprep.subr.mxu0 0.0
    %1649 = vmatpush1.msra.mxu0 0.0
    %1650 = vmatprep.subr.mxu0 0.0
    %1651 = vmatpush1.msra.mxu0 0.0
    %1652 = vmatprep.subr.mxu0 0.0
    %1653 = vmatpush1.msra.mxu0 0.0
    %1654 = vmatprep.subr.mxu0 0.0
    %1655 = vmatpush1.msra.mxu0 0.0
    %1656 = vmatprep.subr.mxu0 0.0
    %1657 = vmatpush1.msra.mxu0 0.0
    %1658 = vmatprep.mubr.f32.mxu0 0.0
    %v1659 = vand.u32 %v1374, 4294901760
    %v1660 = vsub.f32 %v1374, %v1659
    %v1661 = vand.u32 %v1660, 4294901760
    %1662 = vmatmul.mubr.f32.gmra.mrb[0].mxu0 %v1661
    %v1663 = vpop.f32.mrb[0].mxu0
    %v1664 = vadd.f32 %v1591, %v1663
    %v1665 = vpop.f32.mrb[0].mxu0
    %1666 = vdwg.mxu0
    %1667 = vmatprep.subr.mxu0 0.0
    %1668 = vmatpush1.msra.mxu0 0.0
    %1669 = vmatprep.subr.mxu0 0.0
    %1670 = vmatpush1.msra.mxu0 0.0
    %1671 = vmatprep.subr.mxu0 0.0
    %1672 = vmatpush1.msra.mxu0 0.0
    %1673 = vmatprep.subr.mxu0 0.0
    %1674 = vmatpush1.msra.mxu0 0.0
    %1675 = vmatprep.subr.mxu0 0.0
    %1676 = vmatpush1.msra.mxu0 0.0
    %1677 = vmatprep.subr.mxu0 0.0
    %1678 = vmatpush1.msra.mxu0 0.0
    %1679 = vmatprep.subr.mxu0 0.0
    %1680 = vmatpush1.msra.mxu0 0.0
    %1681 = vmatprep.subr.mxu0 0.0
    %1682 = vmatpush1.msra.mxu0 0.0
    %1683 = vmatprep.subr.mxu0 0.0
    %1684 = vmatpush1.msra.mxu0 0.0
    %1685 = vmatprep.subr.mxu0 0.0
    %1686 = vmatpush1.msra.mxu0 0.0
    %1687 = vmatprep.subr.mxu0 0.0
    %1688 = vmatpush1.msra.mxu0 0.0
    %1689 = vmatprep.subr.mxu0 0.0
    %1690 = vmatpush1.msra.mxu0 0.0
    %1691 = vmatprep.subr.mxu0 0.0
    %1692 = vmatpush1.msra.mxu0 0.0
    %1693 = vmatprep.subr.mxu0 0.0
    %1694 = vmatpush1.msra.mxu0 0.0
    %1695 = vmatprep.subr.mxu0 0.0
    %1696 = vmatpush1.msra.mxu0 0.0
    %1697 = vmatprep.subr.mxu0 0.0
    %1698 = vmatpush1.msra.mxu0 0.0
    %1699 = vmatprep.subr.mxu0 0.0
    %1700 = vmatpush1.msra.mxu0 0.0
    %1701 = vmatprep.subr.mxu0 0.0
    %1702 = vmatpush1.msra.mxu0 0.0
    %1703 = vmatprep.subr.mxu0 0.0
    %1704 = vmatpush1.msra.mxu0 0.0
    %1705 = vmatprep.subr.mxu0 0.0
    %1706 = vmatpush1.msra.mxu0 0.0
    %1707 = vmatprep.subr.mxu0 0.0
    %1708 = vmatpush1.msra.mxu0 0.0
    %1709 = vmatprep.subr.mxu0 0.0
    %1710 = vmatpush1.msra.mxu0 0.0
    %1711 = vmatprep.subr.mxu0 0.0
    %1712 = vmatpush1.msra.mxu0 0.0
    %1713 = vmatprep.subr.mxu0 0.0
    %1714 = vmatpush1.msra.mxu0 0.0
    %1715 = vmatprep.subr.mxu0 0.0
    %1716 = vmatpush1.msra.mxu0 0.0
    %1717 = vmatprep.subr.mxu0 0.0
    %1718 = vmatpush1.msra.mxu0 0.0
    %1719 = vmatprep.subr.mxu0 0.0
    %1720 = vmatpush1.msra.mxu0 0.0
    %1721 = vmatprep.subr.mxu0 0.0
    %1722 = vmatpush1.msra.mxu0 0.0
    %1723 = vmatprep.subr.mxu0 0.0
    %1724 = vmatpush1.msra.mxu0 0.0
    %1725 = vmatprep.subr.mxu0 0.0
    %1726 = vmatpush1.msra.mxu0 0.0
    %1727 = vmatprep.subr.mxu0 0.0
    %1728 = vmatpush1.msra.mxu0 0.0
    %1729 = vmatprep.subr.mxu0 0.0
    %1730 = vmatpush1.msra.mxu0 0.0
    %1731 = vmatprep.mubr.f32.mxu0 0.0
    %v1732 = vand.u32 %v1374, 4294901760
    %1733 = vmatmul.mubr.f32.gmra.mrb[0].mxu0 %v1732
    %v1734 = vpop.f32.mrb[0].mxu0
    %v1735 = vadd.f32 %v1664, %v1734
    %v1736 = vpop.f32.mrb[0].mxu0
    %1737 = vdwg.mxu0
    %1738 = vmatprep.subr.mxu0 0.0
    %1739 = vmatpush1.msra.mxu0 1.0
    %1740 = vmatprep.subr.mxu0 0.0
    %1741 = vmatpush1.msra.mxu0 1.0
    %1742 = vmatprep.subr.mxu0 0.0
    %1743 = vmatpush1.msra.mxu0 1.0
    %1744 = vmatprep.subr.mxu0 0.0
    %1745 = vmatpush1.msra.mxu0 1.0
    %1746 = vmatprep.subr.mxu0 0.0
    %1747 = vmatpush1.msra.mxu0 0.0
    %1748 = vmatprep.subr.mxu0 0.0
    %1749 = vmatpush1.msra.mxu0 0.0
    %1750 = vmatprep.subr.mxu0 0.0
    %1751 = vmatpush1.msra.mxu0 0.0
    %1752 = vmatprep.subr.mxu0 0.0
    %1753 = vmatpush1.msra.mxu0 0.0
    %1754 = vmatprep.subr.mxu0 0.0
    %1755 = vmatpush1.msra.mxu0 0.0
    %1756 = vmatprep.subr.mxu0 0.0
    %1757 = vmatpush1.msra.mxu0 0.0
    %1758 = vmatprep.subr.mxu0 0.0
    %1759 = vmatpush1.msra.mxu0 0.0
    %1760 = vmatprep.subr.mxu0 0.0
    %1761 = vmatpush1.msra.mxu0 0.0
    %1762 = vmatprep.subr.mxu0 0.0
    %1763 = vmatpush1.msra.mxu0 0.0
    %1764 = vmatprep.subr.mxu0 0.0
    %1765 = vmatpush1.msra.mxu0 0.0
    %1766 = vmatprep.subr.mxu0 0.0
    %1767 = vmatpush1.msra.mxu0 0.0
    %1768 = vmatprep.subr.mxu0 0.0
    %1769 = vmatpush1.msra.mxu0 0.0
    %1770 = vmatprep.subr.mxu0 0.0
    %1771 = vmatpush1.msra.mxu0 0.0
    %1772 = vmatprep.subr.mxu0 0.0
    %1773 = vmatpush1.msra.mxu0 0.0
    %1774 = vmatprep.subr.mxu0 0.0
    %1775 = vmatpush1.msra.mxu0 0.0
    %1776 = vmatprep.subr.mxu0 0.0
    %1777 = vmatpush1.msra.mxu0 0.0
    %1778 = vmatprep.subr.mxu0 0.0
    %1779 = vmatpush1.msra.mxu0 0.0
    %1780 = vmatprep.subr.mxu0 0.0
    %1781 = vmatpush1.msra.mxu0 0.0
    %1782 = vmatprep.subr.mxu0 0.0
    %1783 = vmatpush1.msra.mxu0 0.0
    %1784 = vmatprep.subr.mxu0 0.0
    %1785 = vmatpush1.msra.mxu0 0.0
    %1786 = vmatprep.subr.mxu0 0.0
    %1787 = vmatpush1.msra.mxu0 0.0
    %1788 = vmatprep.subr.mxu0 0.0
    %1789 = vmatpush1.msra.mxu0 0.0
    %1790 = vmatprep.subr.mxu0 0.0
    %1791 = vmatpush1.msra.mxu0 0.0
    %1792 = vmatprep.subr.mxu0 0.0
    %1793 = vmatpush1.msra.mxu0 0.0
    %1794 = vmatprep.subr.mxu0 0.0
    %1795 = vmatpush1.msra.mxu0 0.0
    %1796 = vmatprep.subr.mxu0 0.0
    %1797 = vmatpush1.msra.mxu0 0.0
    %1798 = vmatprep.subr.mxu0 0.0
    %1799 = vmatpush1.msra.mxu0 0.0
    %1800 = vmatprep.subr.mxu0 0.0
    %1801 = vmatpush1.msra.mxu0 0.0
    %1802 = vmatprep.mubr.f32.mxu0 0.0
    %v1803 = vand.u32 %v1374, 4294901760
    %1804 = vmatmul.mubr.f32.gmra.mrb[0].mxu0 %v1803
    %v1805 = vpop.f32.mrb[0].mxu0
    %v1806 = vadd.f32 %v1735, %v1805
    %v1807 = vpop.f32.mrb[0].mxu0
    %1808 = vdwg.mxu0
    %s1809 = scalar_lea.vmem [#allocation7], 24
    %v1810 = vld [vmem:[%s1809] sm:$0xff]
    %v1811 = vmul.f32 %v1810, %v52
    %v1813 = vsel %vm55, %v1811, 0
    %1815 = vmatprep.subr.mxu0 0.0
    %1816 = vmatpush1.msra.mxu0 1.0
    %1817 = vmatprep.subr.mxu0 0.0
    %1818 = vmatpush1.msra.mxu0 1.0
    %1819 = vmatprep.subr.mxu0 0.0
    %1820 = vmatpush1.msra.mxu0 1.0
    %1821 = vmatprep.subr.mxu0 0.0
    %1822 = vmatpush1.msra.mxu0 1.0
    %1823 = vmatprep.subr.mxu0 0.0
    %1824 = vmatpush1.msra.mxu0 0.0
    %1825 = vmatprep.subr.mxu0 0.0
    %1826 = vmatpush1.msra.mxu0 0.0
    %1827 = vmatprep.subr.mxu0 0.0
    %1828 = vmatpush1.msra.mxu0 0.0
    %1829 = vmatprep.subr.mxu0 0.0
    %1830 = vmatpush1.msra.mxu0 0.0
    %1831 = vmatprep.subr.mxu0 0.0
    %1832 = vmatpush1.msra.mxu0 0.0
    %1833 = vmatprep.subr.mxu0 0.0
    %1834 = vmatpush1.msra.mxu0 0.0
    %1835 = vmatprep.subr.mxu0 0.0
    %1836 = vmatpush1.msra.mxu0 0.0
    %1837 = vmatprep.subr.mxu0 0.0
    %1838 = vmatpush1.msra.mxu0 0.0
    %1839 = vmatprep.subr.mxu0 0.0
    %1840 = vmatpush1.msra.mxu0 0.0
    %1841 = vmatprep.subr.mxu0 0.0
    %1842 = vmatpush1.msra.mxu0 0.0
    %1843 = vmatprep.subr.mxu0 0.0
    %1844 = vmatpush1.msra.mxu0 0.0
    %1845 = vmatprep.subr.mxu0 0.0
    %1846 = vmatpush1.msra.mxu0 0.0
    %1847 = vmatprep.subr.mxu0 0.0
    %1848 = vmatpush1.msra.mxu0 0.0
    %1849 = vmatprep.subr.mxu0 0.0
    %1850 = vmatpush1.msra.mxu0 0.0
    %1851 = vmatprep.subr.mxu0 0.0
    %1852 = vmatpush1.msra.mxu0 0.0
    %1853 = vmatprep.subr.mxu0 0.0
    %1854 = vmatpush1.msra.mxu0 0.0
    %1855 = vmatprep.subr.mxu0 0.0
    %1856 = vmatpush1.msra.mxu0 0.0
    %1857 = vmatprep.subr.mxu0 0.0
    %1858 = vmatpush1.msra.mxu0 0.0
    %1859 = vmatprep.subr.mxu0 0.0
    %1860 = vmatpush1.msra.mxu0 0.0
    %1861 = vmatprep.subr.mxu0 0.0
    %1862 = vmatpush1.msra.mxu0 0.0
    %1863 = vmatprep.subr.mxu0 0.0
    %1864 = vmatpush1.msra.mxu0 0.0
    %1865 = vmatprep.subr.mxu0 0.0
    %1866 = vmatpush1.msra.mxu0 0.0
    %1867 = vmatprep.subr.mxu0 0.0
    %1868 = vmatpush1.msra.mxu0 0.0
    %1869 = vmatprep.subr.mxu0 0.0
    %1870 = vmatpush1.msra.mxu0 0.0
    %1871 = vmatprep.subr.mxu0 0.0
    %1872 = vmatpush1.msra.mxu0 0.0
    %1873 = vmatprep.subr.mxu0 0.0
    %1874 = vmatpush1.msra.mxu0 0.0
    %1875 = vmatprep.subr.mxu0 0.0
    %1876 = vmatpush1.msra.mxu0 0.0
    %1877 = vmatprep.subr.mxu0 0.0
    %1878 = vmatpush1.msra.mxu0 0.0
    %1879 = vmatprep.mubr.f32.mxu0 0.0
    %v1880 = vand.u32 %v1813, 4294901760
    %v1881 = vsub.f32 %v1813, %v1880
    %v1882 = vand.u32 %v1881, 4294901760
    %v1883 = vsub.f32 %v1881, %v1882
    %v1884 = vand.u32 %v1883, 4294901760
    %1885 = vmatmul.mubr.f32.gmra.mrb[0].mxu0 %v1884
    %v1886 = vpop.f32.mrb[0].mxu0
    %v1887 = vadd.f32 0.0, %v1886
    %v1888 = vpop.f32.mrb[0].mxu0
    %1889 = vdwg.mxu0
    %1890 = vmatprep.subr.mxu0 0.0
    %1891 = vmatpush1.msra.mxu0 0.0
    %1892 = vmatprep.subr.mxu0 0.0
    %1893 = vmatpush1.msra.mxu0 0.0
    %1894 = vmatprep.subr.mxu0 0.0
    %1895 = vmatpush1.msra.mxu0 0.0
    %1896 = vmatprep.subr.mxu0 0.0
    %1897 = vmatpush1.msra.mxu0 0.0
    %1898 = vmatprep.subr.mxu0 0.0
    %1899 = vmatpush1.msra.mxu0 0.0
    %1900 = vmatprep.subr.mxu0 0.0
    %1901 = vmatpush1.msra.mxu0 0.0
    %1902 = vmatprep.subr.mxu0 0.0
    %1903 = vmatpush1.msra.mxu0 0.0
    %1904 = vmatprep.subr.mxu0 0.0
    %1905 = vmatpush1.msra.mxu0 0.0
    %1906 = vmatprep.subr.mxu0 0.0
    %1907 = vmatpush1.msra.mxu0 0.0
    %1908 = vmatprep.subr.mxu0 0.0
    %1909 = vmatpush1.msra.mxu0 0.0
    %1910 = vmatprep.subr.mxu0 0.0
    %1911 = vmatpush1.msra.mxu0 0.0
    %1912 = vmatprep.subr.mxu0 0.0
    %1913 = vmatpush1.msra.mxu0 0.0
    %1914 = vmatprep.subr.mxu0 0.0
    %1915 = vmatpush1.msra.mxu0 0.0
    %1916 = vmatprep.subr.mxu0 0.0
    %1917 = vmatpush1.msra.mxu0 0.0
    %1918 = vmatprep.subr.mxu0 0.0
    %1919 = vmatpush1.msra.mxu0 0.0
    %1920 = vmatprep.subr.mxu0 0.0
    %1921 = vmatpush1.msra.mxu0 0.0
    %1922 = vmatprep.subr.mxu0 0.0
    %1923 = vmatpush1.msra.mxu0 0.0
    %1924 = vmatprep.subr.mxu0 0.0
    %1925 = vmatpush1.msra.mxu0 0.0
    %1926 = vmatprep.subr.mxu0 0.0
    %1927 = vmatpush1.msra.mxu0 0.0
    %1928 = vmatprep.subr.mxu0 0.0
    %1929 = vmatpush1.msra.mxu0 0.0
    %1930 = vmatprep.subr.mxu0 0.0
    %1931 = vmatpush1.msra.mxu0 0.0
    %1932 = vmatprep.subr.mxu0 0.0
    %1933 = vmatpush1.msra.mxu0 0.0
    %1934 = vmatprep.subr.mxu0 0.0
    %1935 = vmatpush1.msra.mxu0 0.0
    %1936 = vmatprep.subr.mxu0 0.0
    %1937 = vmatpush1.msra.mxu0 0.0
    %1938 = vmatprep.subr.mxu0 0.0
    %1939 = vmatpush1.msra.mxu0 0.0
    %1940 = vmatprep.subr.mxu0 0.0
    %1941 = vmatpush1.msra.mxu0 0.0
    %1942 = vmatprep.subr.mxu0 0.0
    %1943 = vmatpush1.msra.mxu0 0.0
    %1944 = vmatprep.subr.mxu0 0.0
    %1945 = vmatpush1.msra.mxu0 0.0
    %1946 = vmatprep.subr.mxu0 0.0
    %1947 = vmatpush1.msra.mxu0 0.0
    %1948 = vmatprep.subr.mxu0 0.0
    %1949 = vmatpush1.msra.mxu0 0.0
    %1950 = vmatprep.subr.mxu0 0.0
    %1951 = vmatpush1.msra.mxu0 0.0
    %1952 = vmatprep.subr.mxu0 0.0
    %1953 = vmatpush1.msra.mxu0 0.0
    %1954 = vmatprep.mubr.f32.mxu0 0.0
    %v1955 = vand.u32 %v1813, 4294901760
    %1956 = vmatmul.mubr.f32.gmra.mrb[0].mxu0 %v1955
    %v1957 = vpop.f32.mrb[0].mxu0
    %v1958 = vadd.f32 %v1887, %v1957
    %v1959 = vpop.f32.mrb[0].mxu0
    %1960 = vdwg.mxu0
    %1961 = vmatprep.subr.mxu0 0.0
    %1962 = vmatpush1.msra.mxu0 0.0
    %1963 = vmatprep.subr.mxu0 0.0
    %1964 = vmatpush1.msra.mxu0 0.0
    %1965 = vmatprep.subr.mxu0 0.0
    %1966 = vmatpush1.msra.mxu0 0.0
    %1967 = vmatprep.subr.mxu0 0.0
    %1968 = vmatpush1.msra.mxu0 0.0
    %1969 = vmatprep.subr.mxu0 0.0
    %1970 = vmatpush1.msra.mxu0 0.0
    %1971 = vmatprep.subr.mxu0 0.0
    %1972 = vmatpush1.msra.mxu0 0.0
    %1973 = vmatprep.subr.mxu0 0.0
    %1974 = vmatpush1.msra.mxu0 0.0
    %1975 = vmatprep.subr.mxu0 0.0
    %1976 = vmatpush1.msra.mxu0 0.0
    %1977 = vmatprep.subr.mxu0 0.0
    %1978 = vmatpush1.msra.mxu0 0.0
    %1979 = vmatprep.subr.mxu0 0.0
    %1980 = vmatpush1.msra.mxu0 0.0
    %1981 = vmatprep.subr.mxu0 0.0
    %1982 = vmatpush1.msra.mxu0 0.0
    %1983 = vmatprep.subr.mxu0 0.0
    %1984 = vmatpush1.msra.mxu0 0.0
    %1985 = vmatprep.subr.mxu0 0.0
    %1986 = vmatpush1.msra.mxu0 0.0
    %1987 = vmatprep.subr.mxu0 0.0
    %1988 = vmatpush1.msra.mxu0 0.0
    %1989 = vmatprep.subr.mxu0 0.0
    %1990 = vmatpush1.msra.mxu0 0.0
    %1991 = vmatprep.subr.mxu0 0.0
    %1992 = vmatpush1.msra.mxu0 0.0
    %1993 = vmatprep.subr.mxu0 0.0
    %1994 = vmatpush1.msra.mxu0 0.0
    %1995 = vmatprep.subr.mxu0 0.0
    %1996 = vmatpush1.msra.mxu0 0.0
    %1997 = vmatprep.subr.mxu0 0.0
    %1998 = vmatpush1.msra.mxu0 0.0
    %1999 = vmatprep.subr.mxu0 0.0
    %2000 = vmatpush1.msra.mxu0 0.0
    %2001 = vmatprep.subr.mxu0 0.0
    %2002 = vmatpush1.msra.mxu0 0.0
    %2003 = vmatprep.subr.mxu0 0.0
    %2004 = vmatpush1.msra.mxu0 0.0
    %2005 = vmatprep.subr.mxu0 0.0
    %2006 = vmatpush1.msra.mxu0 0.0
    %2007 = vmatprep.subr.mxu0 0.0
    %2008 = vmatpush1.msra.mxu0 0.0
    %2009 = vmatprep.subr.mxu0 0.0
    %2010 = vmatpush1.msra.mxu0 0.0
    %2011 = vmatprep.subr.mxu0 0.0
    %2012 = vmatpush1.msra.mxu0 0.0
    %2013 = vmatprep.subr.mxu0 0.0
    %2014 = vmatpush1.msra.mxu0 0.0
    %2015 = vmatprep.subr.mxu0 0.0
    %2016 = vmatpush1.msra.mxu0 0.0
    %2017 = vmatprep.subr.mxu0 0.0
    %2018 = vmatpush1.msra.mxu0 0.0
    %2019 = vmatprep.subr.mxu0 0.0
    %2020 = vmatpush1.msra.mxu0 0.0
    %2021 = vmatprep.subr.mxu0 0.0
    %2022 = vmatpush1.msra.mxu0 0.0
    %2023 = vmatprep.subr.mxu0 0.0
    %2024 = vmatpush1.msra.mxu0 0.0
    %2025 = vmatprep.mubr.f32.mxu0 0.0
    %v2026 = vand.u32 %v1813, 4294901760
    %v2027 = vsub.f32 %v1813, %v2026
    %2028 = vmatmul.mubr.f32.gmra.mrb[0].mxu0 %v2027
    %v2029 = vpop.f32.mrb[0].mxu0
    %v2030 = vadd.f32 %v1958, %v2029
    %v2031 = vpop.f32.mrb[0].mxu0
    %2032 = vdwg.mxu0
    %2033 = vmatprep.subr.mxu0 0.0
    %2034 = vmatpush1.msra.mxu0 1.0
    %2035 = vmatprep.subr.mxu0 0.0
    %2036 = vmatpush1.msra.mxu0 1.0
    %2037 = vmatprep.subr.mxu0 0.0
    %2038 = vmatpush1.msra.mxu0 1.0
    %2039 = vmatprep.subr.mxu0 0.0
    %2040 = vmatpush1.msra.mxu0 1.0
    %2041 = vmatprep.subr.mxu0 0.0
    %2042 = vmatpush1.msra.mxu0 0.0
    %2043 = vmatprep.subr.mxu0 0.0
    %2044 = vmatpush1.msra.mxu0 0.0
    %2045 = vmatprep.subr.mxu0 0.0
    %2046 = vmatpush1.msra.mxu0 0.0
    %2047 = vmatprep.subr.mxu0 0.0
    %2048 = vmatpush1.msra.mxu0 0.0
    %2049 = vmatprep.subr.mxu0 0.0
    %2050 = vmatpush1.msra.mxu0 0.0
    %2051 = vmatprep.subr.mxu0 0.0
    %2052 = vmatpush1.msra.mxu0 0.0
    %2053 = vmatprep.subr.mxu0 0.0
    %2054 = vmatpush1.msra.mxu0 0.0
    %2055 = vmatprep.subr.mxu0 0.0
    %2056 = vmatpush1.msra.mxu0 0.0
    %2057 = vmatprep.subr.mxu0 0.0
    %2058 = vmatpush1.msra.mxu0 0.0
    %2059 = vmatprep.subr.mxu0 0.0
    %2060 = vmatpush1.msra.mxu0 0.0
    %2061 = vmatprep.subr.mxu0 0.0
    %2062 = vmatpush1.msra.mxu0 0.0
    %2063 = vmatprep.subr.mxu0 0.0
    %2064 = vmatpush1.msra.mxu0 0.0
    %2065 = vmatprep.subr.mxu0 0.0
    %2066 = vmatpush1.msra.mxu0 0.0
    %2067 = vmatprep.subr.mxu0 0.0
    %2068 = vmatpush1.msra.mxu0 0.0
    %2069 = vmatprep.subr.mxu0 0.0
    %2070 = vmatpush1.msra.mxu0 0.0
    %2071 = vmatprep.subr.mxu0 0.0
    %2072 = vmatpush1.msra.mxu0 0.0
    %2073 = vmatprep.subr.mxu0 0.0
    %2074 = vmatpush1.msra.mxu0 0.0
    %2075 = vmatprep.subr.mxu0 0.0
    %2076 = vmatpush1.msra.mxu0 0.0
    %2077 = vmatprep.subr.mxu0 0.0
    %2078 = vmatpush1.msra.mxu0 0.0
    %2079 = vmatprep.subr.mxu0 0.0
    %2080 = vmatpush1.msra.mxu0 0.0
    %2081 = vmatprep.subr.mxu0 0.0
    %2082 = vmatpush1.msra.mxu0 0.0
    %2083 = vmatprep.subr.mxu0 0.0
    %2084 = vmatpush1.msra.mxu0 0.0
    %2085 = vmatprep.subr.mxu0 0.0
    %2086 = vmatpush1.msra.mxu0 0.0
    %2087 = vmatprep.subr.mxu0 0.0
    %2088 = vmatpush1.msra.mxu0 0.0
    %2089 = vmatprep.subr.mxu0 0.0
    %2090 = vmatpush1.msra.mxu0 0.0
    %2091 = vmatprep.subr.mxu0 0.0
    %2092 = vmatpush1.msra.mxu0 0.0
    %2093 = vmatprep.subr.mxu0 0.0
    %2094 = vmatpush1.msra.mxu0 0.0
    %2095 = vmatprep.subr.mxu0 0.0
    %2096 = vmatpush1.msra.mxu0 0.0
    %2097 = vmatprep.mubr.f32.mxu0 0.0
    %v2098 = vand.u32 %v1813, 4294901760
    %v2099 = vsub.f32 %v1813, %v2098
    %v2100 = vand.u32 %v2099, 4294901760
    %2101 = vmatmul.mubr.f32.gmra.mrb[0].mxu0 %v2100
    %v2102 = vpop.f32.mrb[0].mxu0
    %v2103 = vadd.f32 %v2030, %v2102
    %v2104 = vpop.f32.mrb[0].mxu0
    %2105 = vdwg.mxu0
    %2106 = vmatprep.subr.mxu0 0.0
    %2107 = vmatpush1.msra.mxu0 0.0
    %2108 = vmatprep.subr.mxu0 0.0
    %2109 = vmatpush1.msra.mxu0 0.0
    %2110 = vmatprep.subr.mxu0 0.0
    %2111 = vmatpush1.msra.mxu0 0.0
    %2112 = vmatprep.subr.mxu0 0.0
    %2113 = vmatpush1.msra.mxu0 0.0
    %2114 = vmatprep.subr.mxu0 0.0
    %2115 = vmatpush1.msra.mxu0 0.0
    %2116 = vmatprep.subr.mxu0 0.0
    %2117 = vmatpush1.msra.mxu0 0.0
    %2118 = vmatprep.subr.mxu0 0.0
    %2119 = vmatpush1.msra.mxu0 0.0
    %2120 = vmatprep.subr.mxu0 0.0
    %2121 = vmatpush1.msra.mxu0 0.0
    %2122 = vmatprep.subr.mxu0 0.0
    %2123 = vmatpush1.msra.mxu0 0.0
    %2124 = vmatprep.subr.mxu0 0.0
    %2125 = vmatpush1.msra.mxu0 0.0
    %2126 = vmatprep.subr.mxu0 0.0
    %2127 = vmatpush1.msra.mxu0 0.0
    %2128 = vmatprep.subr.mxu0 0.0
    %2129 = vmatpush1.msra.mxu0 0.0
    %2130 = vmatprep.subr.mxu0 0.0
    %2131 = vmatpush1.msra.mxu0 0.0
    %2132 = vmatprep.subr.mxu0 0.0
    %2133 = vmatpush1.msra.mxu0 0.0
    %2134 = vmatprep.subr.mxu0 0.0
    %2135 = vmatpush1.msra.mxu0 0.0
    %2136 = vmatprep.subr.mxu0 0.0
    %2137 = vmatpush1.msra.mxu0 0.0
    %2138 = vmatprep.subr.mxu0 0.0
    %2139 = vmatpush1.msra.mxu0 0.0
    %2140 = vmatprep.subr.mxu0 0.0
    %2141 = vmatpush1.msra.mxu0 0.0
    %2142 = vmatprep.subr.mxu0 0.0
    %2143 = vmatpush1.msra.mxu0 0.0
    %2144 = vmatprep.subr.mxu0 0.0
    %2145 = vmatpush1.msra.mxu0 0.0
    %2146 = vmatprep.subr.mxu0 0.0
    %2147 = vmatpush1.msra.mxu0 0.0
    %2148 = vmatprep.subr.mxu0 0.0
    %2149 = vmatpush1.msra.mxu0 0.0
    %2150 = vmatprep.subr.mxu0 0.0
    %2151 = vmatpush1.msra.mxu0 0.0
    %2152 = vmatprep.subr.mxu0 0.0
    %2153 = vmatpush1.msra.mxu0 0.0
    %2154 = vmatprep.subr.mxu0 0.0
    %2155 = vmatpush1.msra.mxu0 0.0
    %2156 = vmatprep.subr.mxu0 0.0
    %2157 = vmatpush1.msra.mxu0 0.0
    %2158 = vmatprep.subr.mxu0 0.0
    %2159 = vmatpush1.msra.mxu0 0.0
    %2160 = vmatprep.subr.mxu0 0.0
    %2161 = vmatpush1.msra.mxu0 0.0
    %2162 = vmatprep.subr.mxu0 0.0
    %2163 = vmatpush1.msra.mxu0 0.0
    %2164 = vmatprep.subr.mxu0 0.0
    %2165 = vmatpush1.msra.mxu0 0.0
    %2166 = vmatprep.subr.mxu0 0.0
    %2167 = vmatpush1.msra.mxu0 0.0
    %2168 = vmatprep.subr.mxu0 0.0
    %2169 = vmatpush1.msra.mxu0 0.0
    %2170 = vmatprep.mubr.f32.mxu0 0.0
    %v2171 = vand.u32 %v1813, 4294901760
    %2172 = vmatmul.mubr.f32.gmra.mrb[0].mxu0 %v2171
    %v2173 = vpop.f32.mrb[0].mxu0
    %v2174 = vadd.f32 %v2103, %v2173
    %v2175 = vpop.f32.mrb[0].mxu0
    %2176 = vdwg.mxu0
    %2177 = vmatprep.subr.mxu0 0.0
    %2178 = vmatpush1.msra.mxu0 1.0
    %2179 = vmatprep.subr.mxu0 0.0
    %2180 = vmatpush1.msra.mxu0 1.0
    %2181 = vmatprep.subr.mxu0 0.0
    %2182 = vmatpush1.msra.mxu0 1.0
    %2183 = vmatprep.subr.mxu0 0.0
    %2184 = vmatpush1.msra.mxu0 1.0
    %2185 = vmatprep.subr.mxu0 0.0
    %2186 = vmatpush1.msra.mxu0 0.0
    %2187 = vmatprep.subr.mxu0 0.0
    %2188 = vmatpush1.msra.mxu0 0.0
    %2189 = vmatprep.subr.mxu0 0.0
    %2190 = vmatpush1.msra.mxu0 0.0
    %2191 = vmatprep.subr.mxu0 0.0
    %2192 = vmatpush1.msra.mxu0 0.0
    %2193 = vmatprep.subr.mxu0 0.0
    %2194 = vmatpush1.msra.mxu0 0.0
    %2195 = vmatprep.subr.mxu0 0.0
    %2196 = vmatpush1.msra.mxu0 0.0
    %2197 = vmatprep.subr.mxu0 0.0
    %2198 = vmatpush1.msra.mxu0 0.0
    %2199 = vmatprep.subr.mxu0 0.0
    %2200 = vmatpush1.msra.mxu0 0.0
    %2201 = vmatprep.subr.mxu0 0.0
    %2202 = vmatpush1.msra.mxu0 0.0
    %2203 = vmatprep.subr.mxu0 0.0
    %2204 = vmatpush1.msra.mxu0 0.0
    %2205 = vmatprep.subr.mxu0 0.0
    %2206 = vmatpush1.msra.mxu0 0.0
    %2207 = vmatprep.subr.mxu0 0.0
    %2208 = vmatpush1.msra.mxu0 0.0
    %2209 = vmatprep.subr.mxu0 0.0
    %2210 = vmatpush1.msra.mxu0 0.0
    %2211 = vmatprep.subr.mxu0 0.0
    %2212 = vmatpush1.msra.mxu0 0.0
    %2213 = vmatprep.subr.mxu0 0.0
    %2214 = vmatpush1.msra.mxu0 0.0
    %2215 = vmatprep.subr.mxu0 0.0
    %2216 = vmatpush1.msra.mxu0 0.0
    %2217 = vmatprep.subr.mxu0 0.0
    %2218 = vmatpush1.msra.mxu0 0.0
    %2219 = vmatprep.subr.mxu0 0.0
    %2220 = vmatpush1.msra.mxu0 0.0
    %2221 = vmatprep.subr.mxu0 0.0
    %2222 = vmatpush1.msra.mxu0 0.0
    %2223 = vmatprep.subr.mxu0 0.0
    %2224 = vmatpush1.msra.mxu0 0.0
    %2225 = vmatprep.subr.mxu0 0.0
    %2226 = vmatpush1.msra.mxu0 0.0
    %2227 = vmatprep.subr.mxu0 0.0
    %2228 = vmatpush1.msra.mxu0 0.0
    %2229 = vmatprep.subr.mxu0 0.0
    %2230 = vmatpush1.msra.mxu0 0.0
    %2231 = vmatprep.subr.mxu0 0.0
    %2232 = vmatpush1.msra.mxu0 0.0
    %2233 = vmatprep.subr.mxu0 0.0
    %2234 = vmatpush1.msra.mxu0 0.0
    %2235 = vmatprep.subr.mxu0 0.0
    %2236 = vmatpush1.msra.mxu0 0.0
    %2237 = vmatprep.subr.mxu0 0.0
    %2238 = vmatpush1.msra.mxu0 0.0
    %2239 = vmatprep.subr.mxu0 0.0
    %2240 = vmatpush1.msra.mxu0 0.0
    %2241 = vmatprep.mubr.f32.mxu0 0.0
    %v2242 = vand.u32 %v1813, 4294901760
    %2243 = vmatmul.mubr.f32.gmra.mrb[0].mxu0 %v2242
    %v2244 = vpop.f32.mrb[0].mxu0
    %v2245 = vadd.f32 %v2174, %v2244
    %v2246 = vpop.f32.mrb[0].mxu0
    %2247 = vdwg.mxu0
    %s2248 = scalar_lea.vmem [#allocation7], 32
    %v2249 = vld [vmem:[%s2248] sm:$0xff]
    %v2250 = vmul.f32 %v2249, %v52
    %v2252 = vsel %vm55, %v2250, 0
    %2254 = vmatprep.subr.mxu0 0.0
    %2255 = vmatpush1.msra.mxu0 1.0
    %2256 = vmatprep.subr.mxu0 0.0
    %2257 = vmatpush1.msra.mxu0 1.0
    %2258 = vmatprep.subr.mxu0 0.0
    %2259 = vmatpush1.msra.mxu0 1.0
    %2260 = vmatprep.subr.mxu0 0.0
    %2261 = vmatpush1.msra.mxu0 1.0
    %2262 = vmatprep.subr.mxu0 0.0
    %2263 = vmatpush1.msra.mxu0 0.0
    %2264 = vmatprep.subr.mxu0 0.0
    %2265 = vmatpush1.msra.mxu0 0.0
    %2266 = vmatprep.subr.mxu0 0.0
    %2267 = vmatpush1.msra.mxu0 0.0
    %2268 = vmatprep.subr.mxu0 0.0
    %2269 = vmatpush1.msra.mxu0 0.0
    %2270 = vmatprep.subr.mxu0 0.0
    %2271 = vmatpush1.msra.mxu0 0.0
    %2272 = vmatprep.subr.mxu0 0.0
    %2273 = vmatpush1.msra.mxu0 0.0
    %2274 = vmatprep.subr.mxu0 0.0
    %2275 = vmatpush1.msra.mxu0 0.0
    %2276 = vmatprep.subr.mxu0 0.0
    %2277 = vmatpush1.msra.mxu0 0.0
    %2278 = vmatprep.subr.mxu0 0.0
    %2279 = vmatpush1.msra.mxu0 0.0
    %2280 = vmatprep.subr.mxu0 0.0
    %2281 = vmatpush1.msra.mxu0 0.0
    %2282 = vmatprep.subr.mxu0 0.0
    %2283 = vmatpush1.msra.mxu0 0.0
    %2284 = vmatprep.subr.mxu0 0.0
    %2285 = vmatpush1.msra.mxu0 0.0
    %2286 = vmatprep.subr.mxu0 0.0
    %2287 = vmatpush1.msra.mxu0 0.0
    %2288 = vmatprep.subr.mxu0 0.0
    %2289 = vmatpush1.msra.mxu0 0.0
    %2290 = vmatprep.subr.mxu0 0.0
    %2291 = vmatpush1.msra.mxu0 0.0
    %2292 = vmatprep.subr.mxu0 0.0
    %2293 = vmatpush1.msra.mxu0 0.0
    %2294 = vmatprep.subr.mxu0 0.0
    %2295 = vmatpush1.msra.mxu0 0.0
    %2296 = vmatprep.subr.mxu0 0.0
    %2297 = vmatpush1.msra.mxu0 0.0
    %2298 = vmatprep.subr.mxu0 0.0
    %2299 = vmatpush1.msra.mxu0 0.0
    %2300 = vmatprep.subr.mxu0 0.0
    %2301 = vmatpush1.msra.mxu0 0.0
    %2302 = vmatprep.subr.mxu0 0.0
    %2303 = vmatpush1.msra.mxu0 0.0
    %2304 = vmatprep.subr.mxu0 0.0
    %2305 = vmatpush1.msra.mxu0 0.0
    %2306 = vmatprep.subr.mxu0 0.0
    %2307 = vmatpush1.msra.mxu0 0.0
    %2308 = vmatprep.subr.mxu0 0.0
    %2309 = vmatpush1.msra.mxu0 0.0
    %2310 = vmatprep.subr.mxu0 0.0
    %2311 = vmatpush1.msra.mxu0 0.0
    %2312 = vmatprep.subr.mxu0 0.0
    %2313 = vmatpush1.msra.mxu0 0.0
    %2314 = vmatprep.subr.mxu0 0.0
    %2315 = vmatpush1.msra.mxu0 0.0
    %2316 = vmatprep.subr.mxu0 0.0
    %2317 = vmatpush1.msra.mxu0 0.0
    %2318 = vmatprep.mubr.f32.mxu0 0.0
    %v2319 = vand.u32 %v2252, 4294901760
    %v2320 = vsub.f32 %v2252, %v2319
    %v2321 = vand.u32 %v2320, 4294901760
    %v2322 = vsub.f32 %v2320, %v2321
    %v2323 = vand.u32 %v2322, 4294901760
    %2324 = vmatmul.mubr.f32.gmra.mrb[0].mxu0 %v2323
    %v2325 = vpop.f32.mrb[0].mxu0
    %v2326 = vadd.f32 0.0, %v2325
    %v2327 = vpop.f32.mrb[0].mxu0
    %2328 = vdwg.mxu0
    %2329 = vmatprep.subr.mxu0 0.0
    %2330 = vmatpush1.msra.mxu0 0.0
    %2331 = vmatprep.subr.mxu0 0.0
    %2332 = vmatpush1.msra.mxu0 0.0
    %2333 = vmatprep.subr.mxu0 0.0
    %2334 = vmatpush1.msra.mxu0 0.0
    %2335 = vmatprep.subr.mxu0 0.0
    %2336 = vmatpush1.msra.mxu0 0.0
    %2337 = vmatprep.subr.mxu0 0.0
    %2338 = vmatpush1.msra.mxu0 0.0
    %2339 = vmatprep.subr.mxu0 0.0
    %2340 = vmatpush1.msra.mxu0 0.0
    %2341 = vmatprep.subr.mxu0 0.0
    %2342 = vmatpush1.msra.mxu0 0.0
    %2343 = vmatprep.subr.mxu0 0.0
    %2344 = vmatpush1.msra.mxu0 0.0
    %2345 = vmatprep.subr.mxu0 0.0
    %2346 = vmatpush1.msra.mxu0 0.0
    %2347 = vmatprep.subr.mxu0 0.0
    %2348 = vmatpush1.msra.mxu0 0.0
    %2349 = vmatprep.subr.mxu0 0.0
    %2350 = vmatpush1.msra.mxu0 0.0
    %2351 = vmatprep.subr.mxu0 0.0
    %2352 = vmatpush1.msra.mxu0 0.0
    %2353 = vmatprep.subr.mxu0 0.0
    %2354 = vmatpush1.msra.mxu0 0.0
    %2355 = vmatprep.subr.mxu0 0.0
    %2356 = vmatpush1.msra.mxu0 0.0
    %2357 = vmatprep.subr.mxu0 0.0
    %2358 = vmatpush1.msra.mxu0 0.0
    %2359 = vmatprep.subr.mxu0 0.0
    %2360 = vmatpush1.msra.mxu0 0.0
    %2361 = vmatprep.subr.mxu0 0.0
    %2362 = vmatpush1.msra.mxu0 0.0
    %2363 = vmatprep.subr.mxu0 0.0
    %2364 = vmatpush1.msra.mxu0 0.0
    %2365 = vmatprep.subr.mxu0 0.0
    %2366 = vmatpush1.msra.mxu0 0.0
    %2367 = vmatprep.subr.mxu0 0.0
    %2368 = vmatpush1.msra.mxu0 0.0
    %2369 = vmatprep.subr.mxu0 0.0
    %2370 = vmatpush1.msra.mxu0 0.0
    %2371 = vmatprep.subr.mxu0 0.0
    %2372 = vmatpush1.msra.mxu0 0.0
    %2373 = vmatprep.subr.mxu0 0.0
    %2374 = vmatpush1.msra.mxu0 0.0
    %2375 = vmatprep.subr.mxu0 0.0
    %2376 = vmatpush1.msra.mxu0 0.0
    %2377 = vmatprep.subr.mxu0 0.0
    %2378 = vmatpush1.msra.mxu0 0.0
    %2379 = vmatprep.subr.mxu0 0.0
    %2380 = vmatpush1.msra.mxu0 0.0
    %2381 = vmatprep.subr.mxu0 0.0
    %2382 = vmatpush1.msra.mxu0 0.0
    %2383 = vmatprep.subr.mxu0 0.0
    %2384 = vmatpush1.msra.mxu0 0.0
    %2385 = vmatprep.subr.mxu0 0.0
    %2386 = vmatpush1.msra.mxu0 0.0
    %2387 = vmatprep.subr.mxu0 0.0
    %2388 = vmatpush1.msra.mxu0 0.0
    %2389 = vmatprep.subr.mxu0 0.0
    %2390 = vmatpush1.msra.mxu0 0.0
    %2391 = vmatprep.subr.mxu0 0.0
    %2392 = vmatpush1.msra.mxu0 0.0
    %2393 = vmatprep.mubr.f32.mxu0 0.0
    %v2394 = vand.u32 %v2252, 4294901760
    %2395 = vmatmul.mubr.f32.gmra.mrb[0].mxu0 %v2394
    %v2396 = vpop.f32.mrb[0].mxu0
    %v2397 = vadd.f32 %v2326, %v2396
    %v2398 = vpop.f32.mrb[0].mxu0
    %2399 = vdwg.mxu0
    %2400 = vmatprep.subr.mxu0 0.0
    %2401 = vmatpush1.msra.mxu0 0.0
    %2402 = vmatprep.subr.mxu0 0.0
    %2403 = vmatpush1.msra.mxu0 0.0
    %2404 = vmatprep.subr.mxu0 0.0
    %2405 = vmatpush1.msra.mxu0 0.0
    %2406 = vmatprep.subr.mxu0 0.0
    %2407 = vmatpush1.msra.mxu0 0.0
    %2408 = vmatprep.subr.mxu0 0.0
    %2409 = vmatpush1.msra.mxu0 0.0
    %2410 = vmatprep.subr.mxu0 0.0
    %2411 = vmatpush1.msra.mxu0 0.0
    %2412 = vmatprep.subr.mxu0 0.0
    %2413 = vmatpush1.msra.mxu0 0.0
    %2414 = vmatprep.subr.mxu0 0.0
    %2415 = vmatpush1.msra.mxu0 0.0
    %2416 = vmatprep.subr.mxu0 0.0
    %2417 = vmatpush1.msra.mxu0 0.0
    %2418 = vmatprep.subr.mxu0 0.0
    %2419 = vmatpush1.msra.mxu0 0.0
    %2420 = vmatprep.subr.mxu0 0.0
    %2421 = vmatpush1.msra.mxu0 0.0
    %2422 = vmatprep.subr.mxu0 0.0
    %2423 = vmatpush1.msra.mxu0 0.0
    %2424 = vmatprep.subr.mxu0 0.0
    %2425 = vmatpush1.msra.mxu0 0.0
    %2426 = vmatprep.subr.mxu0 0.0
    %2427 = vmatpush1.msra.mxu0 0.0
    %2428 = vmatprep.subr.mxu0 0.0
    %2429 = vmatpush1.msra.mxu0 0.0
    %2430 = vmatprep.subr.mxu0 0.0
    %2431 = vmatpush1.msra.mxu0 0.0
    %2432 = vmatprep.subr.mxu0 0.0
    %2433 = vmatpush1.msra.mxu0 0.0
    %2434 = vmatprep.subr.mxu0 0.0
    %2435 = vmatpush1.msra.mxu0 0.0
    %2436 = vmatprep.subr.mxu0 0.0
    %2437 = vmatpush1.msra.mxu0 0.0
    %2438 = vmatprep.subr.mxu0 0.0
    %2439 = vmatpush1.msra.mxu0 0.0
    %2440 = vmatprep.subr.mxu0 0.0
    %2441 = vmatpush1.msra.mxu0 0.0
    %2442 = vmatprep.subr.mxu0 0.0
    %2443 = vmatpush1.msra.mxu0 0.0
    %2444 = vmatprep.subr.mxu0 0.0
    %2445 = vmatpush1.msra.mxu0 0.0
    %2446 = vmatprep.subr.mxu0 0.0
    %2447 = vmatpush1.msra.mxu0 0.0
    %2448 = vmatprep.subr.mxu0 0.0
    %2449 = vmatpush1.msra.mxu0 0.0
    %2450 = vmatprep.subr.mxu0 0.0
    %2451 = vmatpush1.msra.mxu0 0.0
    %2452 = vmatprep.subr.mxu0 0.0
    %2453 = vmatpush1.msra.mxu0 0.0
    %2454 = vmatprep.subr.mxu0 0.0
    %2455 = vmatpush1.msra.mxu0 0.0
    %2456 = vmatprep.subr.mxu0 0.0
    %2457 = vmatpush1.msra.mxu0 0.0
    %2458 = vmatprep.subr.mxu0 0.0
    %2459 = vmatpush1.msra.mxu0 0.0
    %2460 = vmatprep.subr.mxu0 0.0
    %2461 = vmatpush1.msra.mxu0 0.0
    %2462 = vmatprep.subr.mxu0 0.0
    %2463 = vmatpush1.msra.mxu0 0.0
    %2464 = vmatprep.mubr.f32.mxu0 0.0
    %v2465 = vand.u32 %v2252, 4294901760
    %v2466 = vsub.f32 %v2252, %v2465
    %2467 = vmatmul.mubr.f32.gmra.mrb[0].mxu0 %v2466
    %v2468 = vpop.f32.mrb[0].mxu0
    %v2469 = vadd.f32 %v2397, %v2468
    %v2470 = vpop.f32.mrb[0].mxu0
    %2471 = vdwg.mxu0
    %2472 = vmatprep.subr.mxu0 0.0
    %2473 = vmatpush1.msra.mxu0 1.0
    %2474 = vmatprep.subr.mxu0 0.0
    %2475 = vmatpush1.msra.mxu0 1.0
    %2476 = vmatprep.subr.mxu0 0.0
    %2477 = vmatpush1.msra.mxu0 1.0
    %2478 = vmatprep.subr.mxu0 0.0
    %2479 = vmatpush1.msra.mxu0 1.0
    %2480 = vmatprep.subr.mxu0 0.0
    %2481 = vmatpush1.msra.mxu0 0.0
    %2482 = vmatprep.subr.mxu0 0.0
    %2483 = vmatpush1.msra.mxu0 0.0
    %2484 = vmatprep.subr.mxu0 0.0
    %2485 = vmatpush1.msra.mxu0 0.0
    %2486 = vmatprep.subr.mxu0 0.0
    %2487 = vmatpush1.msra.mxu0 0.0
    %2488 = vmatprep.subr.mxu0 0.0
    %2489 = vmatpush1.msra.mxu0 0.0
    %2490 = vmatprep.subr.mxu0 0.0
    %2491 = vmatpush1.msra.mxu0 0.0
    %2492 = vmatprep.subr.mxu0 0.0
    %2493 = vmatpush1.msra.mxu0 0.0
    %2494 = vmatprep.subr.mxu0 0.0
    %2495 = vmatpush1.msra.mxu0 0.0
    %2496 = vmatprep.subr.mxu0 0.0
    %2497 = vmatpush1.msra.mxu0 0.0
    %2498 = vmatprep.subr.mxu0 0.0
    %2499 = vmatpush1.msra.mxu0 0.0
    %2500 = vmatprep.subr.mxu0 0.0
    %2501 = vmatpush1.msra.mxu0 0.0
    %2502 = vmatprep.subr.mxu0 0.0
    %2503 = vmatpush1.msra.mxu0 0.0
    %2504 = vmatprep.subr.mxu0 0.0
    %2505 = vmatpush1.msra.mxu0 0.0
    %2506 = vmatprep.subr.mxu0 0.0
    %2507 = vmatpush1.msra.mxu0 0.0
    %2508 = vmatprep.subr.mxu0 0.0
    %2509 = vmatpush1.msra.mxu0 0.0
    %2510 = vmatprep.subr.mxu0 0.0
    %2511 = vmatpush1.msra.mxu0 0.0
    %2512 = vmatprep.subr.mxu0 0.0
    %2513 = vmatpush1.msra.mxu0 0.0
    %2514 = vmatprep.subr.mxu0 0.0
    %2515 = vmatpush1.msra.mxu0 0.0
    %2516 = vmatprep.subr.mxu0 0.0
    %2517 = vmatpush1.msra.mxu0 0.0
    %2518 = vmatprep.subr.mxu0 0.0
    %2519 = vmatpush1.msra.mxu0 0.0
    %2520 = vmatprep.subr.mxu0 0.0
    %2521 = vmatpush1.msra.mxu0 0.0
    %2522 = vmatprep.subr.mxu0 0.0
    %2523 = vmatpush1.msra.mxu0 0.0
    %2524 = vmatprep.subr.mxu0 0.0
    %2525 = vmatpush1.msra.mxu0 0.0
    %2526 = vmatprep.subr.mxu0 0.0
    %2527 = vmatpush1.msra.mxu0 0.0
    %2528 = vmatprep.subr.mxu0 0.0
    %2529 = vmatpush1.msra.mxu0 0.0
    %2530 = vmatprep.subr.mxu0 0.0
    %2531 = vmatpush1.msra.mxu0 0.0
    %2532 = vmatprep.subr.mxu0 0.0
    %2533 = vmatpush1.msra.mxu0 0.0
    %2534 = vmatprep.subr.mxu0 0.0
    %2535 = vmatpush1.msra.mxu0 0.0
    %2536 = vmatprep.mubr.f32.mxu0 0.0
    %v2537 = vand.u32 %v2252, 4294901760
    %v2538 = vsub.f32 %v2252, %v2537
    %v2539 = vand.u32 %v2538, 4294901760
    %2540 = vmatmul.mubr.f32.gmra.mrb[0].mxu0 %v2539
    %v2541 = vpop.f32.mrb[0].mxu0
    %v2542 = vadd.f32 %v2469, %v2541
    %v2543 = vpop.f32.mrb[0].mxu0
    %2544 = vdwg.mxu0
    %2545 = vmatprep.subr.mxu0 0.0
    %2546 = vmatpush1.msra.mxu0 0.0
    %2547 = vmatprep.subr.mxu0 0.0
    %2548 = vmatpush1.msra.mxu0 0.0
    %2549 = vmatprep.subr.mxu0 0.0
    %2550 = vmatpush1.msra.mxu0 0.0
    %2551 = vmatprep.subr.mxu0 0.0
    %2552 = vmatpush1.msra.mxu0 0.0
    %2553 = vmatprep.subr.mxu0 0.0
    %2554 = vmatpush1.msra.mxu0 0.0
    %2555 = vmatprep.subr.mxu0 0.0
    %2556 = vmatpush1.msra.mxu0 0.0
    %2557 = vmatprep.subr.mxu0 0.0
    %2558 = vmatpush1.msra.mxu0 0.0
    %2559 = vmatprep.subr.mxu0 0.0
    %2560 = vmatpush1.msra.mxu0 0.0
    %2561 = vmatprep.subr.mxu0 0.0
    %2562 = vmatpush1.msra.mxu0 0.0
    %2563 = vmatprep.subr.mxu0 0.0
    %2564 = vmatpush1.msra.mxu0 0.0
    %2565 = vmatprep.subr.mxu0 0.0
    %2566 = vmatpush1.msra.mxu0 0.0
    %2567 = vmatprep.subr.mxu0 0.0
    %2568 = vmatpush1.msra.mxu0 0.0
    %2569 = vmatprep.subr.mxu0 0.0
    %2570 = vmatpush1.msra.mxu0 0.0
    %2571 = vmatprep.subr.mxu0 0.0
    %2572 = vmatpush1.msra.mxu0 0.0
    %2573 = vmatprep.subr.mxu0 0.0
    %2574 = vmatpush1.msra.mxu0 0.0
    %2575 = vmatprep.subr.mxu0 0.0
    %2576 = vmatpush1.msra.mxu0 0.0
    %2577 = vmatprep.subr.mxu0 0.0
    %2578 = vmatpush1.msra.mxu0 0.0
    %2579 = vmatprep.subr.mxu0 0.0
    %2580 = vmatpush1.msra.mxu0 0.0
    %2581 = vmatprep.subr.mxu0 0.0
    %2582 = vmatpush1.msra.mxu0 0.0
    %2583 = vmatprep.subr.mxu0 0.0
    %2584 = vmatpush1.msra.mxu0 0.0
    %2585 = vmatprep.subr.mxu0 0.0
    %2586 = vmatpush1.msra.mxu0 0.0
    %2587 = vmatprep.subr.mxu0 0.0
    %2588 = vmatpush1.msra.mxu0 0.0
    %2589 = vmatprep.subr.mxu0 0.0
    %2590 = vmatpush1.msra.mxu0 0.0
    %2591 = vmatprep.subr.mxu0 0.0
    %2592 = vmatpush1.msra.mxu0 0.0
    %2593 = vmatprep.subr.mxu0 0.0
    %2594 = vmatpush1.msra.mxu0 0.0
    %2595 = vmatprep.subr.mxu0 0.0
    %2596 = vmatpush1.msra.mxu0 0.0
    %2597 = vmatprep.subr.mxu0 0.0
    %2598 = vmatpush1.msra.mxu0 0.0
    %2599 = vmatprep.subr.mxu0 0.0
    %2600 = vmatpush1.msra.mxu0 0.0
    %2601 = vmatprep.subr.mxu0 0.0
    %2602 = vmatpush1.msra.mxu0 0.0
    %2603 = vmatprep.subr.mxu0 0.0
    %2604 = vmatpush1.msra.mxu0 0.0
    %2605 = vmatprep.subr.mxu0 0.0
    %2606 = vmatpush1.msra.mxu0 0.0
    %2607 = vmatprep.subr.mxu0 0.0
    %2608 = vmatpush1.msra.mxu0 0.0
    %2609 = vmatprep.mubr.f32.mxu0 0.0
    %v2610 = vand.u32 %v2252, 4294901760
    %2611 = vmatmul.mubr.f32.gmra.mrb[0].mxu0 %v2610
    %v2612 = vpop.f32.mrb[0].mxu0
    %v2613 = vadd.f32 %v2542, %v2612
    %v2614 = vpop.f32.mrb[0].mxu0
    %2615 = vdwg.mxu0
    %2616 = vmatprep.subr.mxu0 0.0
    %2617 = vmatpush1.msra.mxu0 1.0
    %2618 = vmatprep.subr.mxu0 0.0
    %2619 = vmatpush1.msra.mxu0 1.0
    %2620 = vmatprep.subr.mxu0 0.0
    %2621 = vmatpush1.msra.mxu0 1.0
    %2622 = vmatprep.subr.mxu0 0.0
    %2623 = vmatpush1.msra.mxu0 1.0
    %2624 = vmatprep.subr.mxu0 0.0
    %2625 = vmatpush1.msra.mxu0 0.0
    %2626 = vmatprep.subr.mxu0 0.0
    %2627 = vmatpush1.msra.mxu0 0.0
    %2628 = vmatprep.subr.mxu0 0.0
    %2629 = vmatpush1.msra.mxu0 0.0
    %2630 = vmatprep.subr.mxu0 0.0
    %2631 = vmatpush1.msra.mxu0 0.0
    %2632 = vmatprep.subr.mxu0 0.0
    %2633 = vmatpush1.msra.mxu0 0.0
    %2634 = vmatprep.subr.mxu0 0.0
    %2635 = vmatpush1.msra.mxu0 0.0
    %2636 = vmatprep.subr.mxu0 0.0
    %2637 = vmatpush1.msra.mxu0 0.0
    %2638 = vmatprep.subr.mxu0 0.0
    %2639 = vmatpush1.msra.mxu0 0.0
    %2640 = vmatprep.subr.mxu0 0.0
    %2641 = vmatpush1.msra.mxu0 0.0
    %2642 = vmatprep.subr.mxu0 0.0
    %2643 = vmatpush1.msra.mxu0 0.0
    %2644 = vmatprep.subr.mxu0 0.0
    %2645 = vmatpush1.msra.mxu0 0.0
    %2646 = vmatprep.subr.mxu0 0.0
    %2647 = vmatpush1.msra.mxu0 0.0
    %2648 = vmatprep.subr.mxu0 0.0
    %2649 = vmatpush1.msra.mxu0 0.0
    %2650 = vmatprep.subr.mxu0 0.0
    %2651 = vmatpush1.msra.mxu0 0.0
    %2652 = vmatprep.subr.mxu0 0.0
    %2653 = vmatpush1.msra.mxu0 0.0
    %2654 = vmatprep.subr.mxu0 0.0
    %2655 = vmatpush1.msra.mxu0 0.0
    %2656 = vmatprep.subr.mxu0 0.0
    %2657 = vmatpush1.msra.mxu0 0.0
    %2658 = vmatprep.subr.mxu0 0.0
    %2659 = vmatpush1.msra.mxu0 0.0
    %2660 = vmatprep.subr.mxu0 0.0
    %2661 = vmatpush1.msra.mxu0 0.0
    %2662 = vmatprep.subr.mxu0 0.0
    %2663 = vmatpush1.msra.mxu0 0.0
    %2664 = vmatprep.subr.mxu0 0.0
    %2665 = vmatpush1.msra.mxu0 0.0
    %2666 = vmatprep.subr.mxu0 0.0
    %2667 = vmatpush1.msra.mxu0 0.0
    %2668 = vmatprep.subr.mxu0 0.0
    %2669 = vmatpush1.msra.mxu0 0.0
    %2670 = vmatprep.subr.mxu0 0.0
    %2671 = vmatpush1.msra.mxu0 0.0
    %2672 = vmatprep.subr.mxu0 0.0
    %2673 = vmatpush1.msra.mxu0 0.0
    %2674 = vmatprep.subr.mxu0 0.0
    %2675 = vmatpush1.msra.mxu0 0.0
    %2676 = vmatprep.subr.mxu0 0.0
    %2677 = vmatpush1.msra.mxu0 0.0
    %2678 = vmatprep.subr.mxu0 0.0
    %2679 = vmatpush1.msra.mxu0 0.0
    %2680 = vmatprep.mubr.f32.mxu0 0.0
    %v2681 = vand.u32 %v2252, 4294901760
    %2682 = vmatmul.mubr.f32.gmra.mrb[0].mxu0 %v2681
    %v2683 = vpop.f32.mrb[0].mxu0
    %v2684 = vadd.f32 %v2613, %v2683
    %v2685 = vpop.f32.mrb[0].mxu0
    %2686 = vdwg.mxu0
    %2688 = vrot.lane.b32.xlu0 %v928, 1
    %v2689 = vpop.permute.xlu0 %2688
    %2692 = vrot.lane.b32.xlu0 %v1367, 2
    %v2693 = vpop.permute.xlu0 %2692
    %2696 = vrot.lane.b32.xlu0 %v1806, 3
    %v2697 = vpop.permute.xlu0 %2696
    %2700 = vrot.lane.b32.xlu0 %v2245, 4
    %v2701 = vpop.permute.xlu0 %2700
    %2704 = vrot.lane.b32.xlu0 %v2684, 5
    %v2705 = vpop.permute.xlu0 %2704
    %vm2707 = vcmask 7168
    %v2708 = vsel %vm2707, %v492, %v2689
    %vm2709 = vcmask 15360
    %v2710 = vsel %vm2709, %v2708, %v2693
    %vm2711 = vcmask 23552
    %v2712 = vsel %vm2711, %v2710, %v2697
    %vm2713 = vcmask 31744
    %v2714 = vsel %vm2713, %v2712, %v2701
    %vm2715 = vcmask 39936
    %v2716 = vsel %vm2715, %v2714, %v2705
    %v2717 = vmax.f32 %v2716, -10.0
    %v2718 = vmin.f32 %v2717, 10.0
    %v2719 = vmul.f32 %v2718, 1.442695
    %v2720 = vpow.pop %v2719
    %v2721 = vadd.f32 %v2720, 1.0
    %v2722 = vlog2.pop %v2721
    %v2723 = vmul.f32 %v2722, 0.6931472
    %v2724 = vmul.f32 -0.5, %v2720
    %v2725 = vadd.f32 %v2724, 1.0
    %v2726 = vmul.f32 %v2725, %v2720
    %v2727 = vand.u32 2147483647, %v2720
    %vm2728 = vcmp.lt.f32.partialorder %v2727, 0.0004427343
    %v2729 = vsel %vm2728, %v2726, %v2723
    %vm2730 = vcmask 48128
    %v2731 = vsel %vm2730, %v2729, 0.0
    %2732 = vadd.xlane.f32.xlu0 %v2731
    %v2733 = vpop.xlane.xlu0 %2732
    %v2734 = vrot.slane %v2733, 4
    %v2735 = vadd.f32 %v2733, %v2734
    %v2736 = vrot.slane %v2735, 2
    %v2737 = vadd.f32 %v2735, %v2736
    %v2738 = vrot.slane %v2737, 1
    %v2739 = vadd.f32 %v2737, %v2738
    %s2740 = vtos %v2739
    %v2741 = vstv %s2740
    %2742 = vst [vmem:[#allocation8] sm:$0xff] %v2741
    // Predicated region
    $region26: #{tpu_custom_call.1} parent=1 // pred_check
      _
    $region27: #{tpu_custom_call.1} parent=1 // pred_check_branch
      %2744 = sbr.rel (0) target = $region29
    $region28: #{tpu_custom_call.1} parent=1 // pred_region
      %s2746 = ssub.s32 128, 128
      %2747 = vsyncadd [#allocation4], %s2746
      %s2749 = sshll.u32 [#allocation8], 4
      %s2750 = int_to_ptr.vmem [resolvable:$true] %s2749
      %2752 = dma.vmem_to_hbm [thread:$0]  %s2750, 128, %s3, [#allocation4]
    $region29: #{tpu_custom_call.1} parent=1 // pred_fallthru
      _
    // Predicated region
    $region30: #{tpu_custom_call.1} parent=1 // pred_check
      _
    $region31: #{tpu_custom_call.1} parent=1 // pred_check_branch
      %2754 = sbr.rel (0) target = $region33
    $region32: #{tpu_custom_call.1} parent=1 // pred_region
      %2755 = dma.done [#allocation4], 128
    $region33: #{tpu_custom_call.1} parent=1 // pred_fallthru
      _
    %2756 = vsyncpa [#allocation3], 1
    %2757 = vsyncpa [#allocation6], 1
    %2758 = vsyncpa [#allocation4], 1

</llo_original>
